<compile_context>
chip_gen: v7x
topology: tpu7x:2x2x1
jax: 0.10.0
libtpu: 0.0.40
codegen_flags: <defaults>
</compile_context>

<pallas_src>
import functools

import jax
import jax.numpy as jnp
from jax.experimental import pallas as pl
from jax.experimental.pallas import tpu as pltpu


def _round_up(x, m):
    return (x + m - 1) // m * m


# ---------------------------------------------------------------------------
# Pallas kernels
# ---------------------------------------------------------------------------
def _gemm_kernel(a_ref, b_ref, s_ref, c_ref, o_ref, *, relu):
    """o = relu_opt((a @ b) * scale + bias); whole K resident per tile."""
    acc = jnp.dot(a_ref[...], b_ref[...], preferred_element_type=jnp.float32)
    r = acc * s_ref[...] + c_ref[...]
    if relu:
        r = jnp.maximum(r, 0.0)
    o_ref[...] = r.astype(o_ref.dtype)


def _gemm_res_kernel(a_ref, b_ref, s_ref, c_ref, r_ref, o_ref):
    """o = relu((a @ b) * scale + bias + residual); fused bottleneck tail."""
    acc = jnp.dot(a_ref[...], b_ref[...], preferred_element_type=jnp.float32)
    r = acc * s_ref[...] + c_ref[...] + r_ref[...].astype(jnp.float32)
    o_ref[...] = jnp.maximum(r, 0.0).astype(o_ref.dtype)


def _gemm_acc_kernel(a_ref, b_ref, s_ref, c_ref, o_ref, acc_ref, *, relu):
    """Fallback for very large K: accumulate over grid axis 2."""
    @pl.when(pl.program_id(2) == 0)
    def _():
        acc_ref[...] = jnp.zeros_like(acc_ref)

    acc_ref[...] += jnp.dot(a_ref[...], b_ref[...],
                            preferred_element_type=jnp.float32)

    @pl.when(pl.program_id(2) == pl.num_programs(2) - 1)
    def _():
        r = acc_ref[...] * s_ref[...] + c_ref[...]
        if relu:
            r = jnp.maximum(r, 0.0)
        o_ref[...] = r.astype(o_ref.dtype)


def _max9_kernel(*refs):
    """Elementwise max over the 9 pooling taps."""
    o_ref = refs[-1]
    m = refs[0][...]
    for r in refs[1:-1]:
        m = jnp.maximum(m, r[...])
    o_ref[...] = m


def _avgpool_kernel(x_ref, o_ref):
    """Mean over the sublane (spatial) axis; lane-dense (1, B*C) output."""
    o_ref[...] = jnp.mean(x_ref[...].astype(jnp.float32), axis=0, keepdims=True)


# ---------------------------------------------------------------------------
# Tiling heuristics
# ---------------------------------------------------------------------------
def _pick_tn(M, N):
    if N % 512 == 0 and M >= 4096:
        return 512
    if N % 256 == 0:
        return 256          # keeps >=2 parallel N blocks for small-M layers (v7x)
    if N % 128 == 0:
        return 128
    return N                 # full-dim block (e.g. N = 64, 1000, num_classes)


def _pick_tm(M, Kp, tn):
    M8 = _round_up(M, 8)
    if M8 <= 512:
        return M8            # whole M in one tile (late layers, FC)
    for c in (1024, 512, 256, 128, 64, 32, 16, 8):
        if M8 % c == 0 and c * Kp * 2 <= (2 << 20) and c * tn * 4 <= (2 << 20):
            return c
    return 8


def _split_k(Kp, tn):
    """Number of K grid steps; 1 whenever the bf16 weight tile fits VMEM."""
    limit = 6 << 20
    if Kp * tn * 2 <= limit:
        return 1
    for ks in range(2, 65):
        tk = Kp // ks
        if Kp % ks == 0 and tk % 128 == 0 and tk * tn * 2 <= limit:
            return ks
    return 1


# ---------------------------------------------------------------------------
# Fused GEMM wrapper (conv-as-GEMM and FC layers)
# ---------------------------------------------------------------------------
def gemm_bn_act(a, wm, scale, bias, *, relu, residual=None,
                out_dtype=jnp.bfloat16):
    """(M,K) @ (Kp,N) on the MXU in bf16, f32 accumulate, fused scale/bias
    (+ optional residual add) (+ optional ReLU) epilogue."""
    M, K = a.shape
    Kp, N = wm.shape

    a = a.astype(jnp.bfloat16)
    if Kp != K:                                   # weight K pre-padded at init
        a = jnp.pad(a, ((0, 0), (0, Kp - K)))

    tn = _pick_tn(M, N)
    tm = _pick_tm(M, Kp, tn)
    Mp = _round_up(M, tm)
    if Mp != M:
        a = jnp.pad(a, ((0, Mp - M), (0, 0)))

    s2 = scale.reshape(1, N).astype(jnp.float32)
    b2 = bias.reshape(1, N).astype(jnp.float32)

    # Residual fusion only needs the single-K path (always true here: K <= 512).
    ks = 1 if residual is not None else _split_k(Kp, tn)

    cost = pl.CostEstimate(
        flops=2 * M * N * K,
        transcendentals=0,
        bytes_accessed=(Mp * Kp * 2 + Kp * N * 2
                        + Mp * N * jnp.dtype(out_dtype).itemsize
                        + (Mp * N * 2 if residual is not None else 0)))

    if ks == 1:
        in_specs = [
            pl.BlockSpec((tm, Kp), lambda i, j: (i, 0)),
            pl.BlockSpec((Kp, tn), lambda i, j: (0, j)),
            pl.BlockSpec((1, tn), lambda i, j: (0, j)),
            pl.BlockSpec((1, tn), lambda i, j: (0, j)),
        ]
        inputs = [a, wm, s2, b2]
        if residual is None:
            kernel = functools.partial(_gemm_kernel, relu=relu)
        else:
            r = residual.reshape(M, N).astype(jnp.bfloat16)
            if Mp != M:
                r = jnp.pad(r, ((0, Mp - M), (0, 0)))
            in_specs.append(pl.BlockSpec((tm, tn), lambda i, j: (i, j)))
            inputs.append(r)
            kernel = _gemm_res_kernel
        out = pl.pallas_call(
            kernel,
            out_shape=jax.ShapeDtypeStruct((Mp, N), out_dtype),
            grid=(Mp // tm, N // tn),
            in_specs=in_specs,
            out_specs=pl.BlockSpec((tm, tn), lambda i, j: (i, j)),
            compiler_params=pltpu.CompilerParams(
                dimension_semantics=("parallel", "parallel")),
            cost_estimate=cost,
        )(*inputs)
    else:
        tk = Kp // ks
        out = pl.pallas_call(
            functools.partial(_gemm_acc_kernel, relu=relu),
            out_shape=jax.ShapeDtypeStruct((Mp, N), out_dtype),
            grid=(Mp // tm, N // tn, ks),
            in_specs=[
                pl.BlockSpec((tm, tk), lambda i, j, k: (i, k)),
                pl.BlockSpec((tk, tn), lambda i, j, k: (k, j)),
                pl.BlockSpec((1, tn), lambda i, j, k: (0, j)),
                pl.BlockSpec((1, tn), lambda i, j, k: (0, j)),
            ],
            out_specs=pl.BlockSpec((tm, tn), lambda i, j, k: (i, j)),
            scratch_shapes=[pltpu.VMEM((tm, tn), jnp.float32)],
            compiler_params=pltpu.CompilerParams(
                dimension_semantics=("parallel", "parallel", "arbitrary")),
            cost_estimate=cost,
        )(a, wm, s2, b2)

    if Mp != M:
        out = out[:M]
    return out


# ---------------------------------------------------------------------------
# Convolution = NHWC im2col (glue) + Pallas GEMM (hot path)
# ---------------------------------------------------------------------------
def _im2col_nhwc(x, kh, kw, stride, pad):
    """NHWC im2col; columns ordered (ki, kj, c) to match the folded weights."""
    B, H, W, C = x.shape
    Ho = (H + 2 * pad - kh) // stride + 1
    Wo = (W + 2 * pad - kw) // stride + 1
    if kh == 1 and kw == 1 and pad == 0:
        xs = x if stride == 1 else x[:, ::stride, ::stride, :]
        return xs.reshape(B * Ho * Wo, C), Ho, Wo
    xp = jnp.pad(x, ((0, 0), (pad, pad), (pad, pad), (0, 0)))
    cols = []
    for i in range(kh):
        for j in range(kw):
            cols.append(xp[:, i:i + stride * Ho:stride,
                           j:j + stride * Wo:stride, :])
    cols = jnp.concatenate(cols, axis=-1)            # (B, Ho, Wo, kh*kw*C)
    return cols.reshape(B * Ho * Wo, kh * kw * C), Ho, Wo


def conv_bn_act(x, wm, scale, bias, kh, kw, *, stride=1, pad=0,
                relu=True, residual=None):
    """Conv (no conv-bias) fused with inference BN, optional ReLU and optional
    residual-add — output stays NHWC bf16."""
    B = x.shape[0]
    N = wm.shape[1]
    cols, Ho, Wo = _im2col_nhwc(x, kh, kw, stride, pad)
    res2 = None if residual is None else residual.reshape(B * Ho * Wo, N)
    out = gemm_bn_act(cols, wm, scale, bias, relu=relu, residual=res2,
                      out_dtype=jnp.bfloat16)
    return out.reshape(B, Ho, Wo, N)


# ---------------------------------------------------------------------------
# Pooling
# ---------------------------------------------------------------------------
def maxpool3x3s2p1(x):
    """MaxPool2d(kernel=3, stride=2, padding=1) on NHWC (pad with -inf)."""
    B, H, W, C = x.shape
    Ho = (H + 2 - 3) // 2 + 1
    Wo = (W + 2 - 3) // 2 + 1
    xp = jnp.pad(x, ((0, 0), (1, 1), (1, 1), (0, 0)),
                 constant_values=-jnp.inf)
    taps = [xp[:, i:i + 2 * Ho:2, j:j + 2 * Wo:2, :].reshape(B * Ho * Wo, C)
            for i in range(3) for j in range(3)]
    out = pl.pallas_call(
        _max9_kernel,
        out_shape=jax.ShapeDtypeStruct((B * Ho * Wo, C), x.dtype),
    )(*taps)
    return out.reshape(B, Ho, Wo, C)


def avgpool6_squeeze(x):
    """AvgPool2d(kernel=6, stride=1) on the 6x6 NHWC map + squeeze -> (B, C)."""
    B, H, W, C = x.shape
    # lane-dense layout: spatial positions along sublanes, B*C along lanes
    xt = jnp.transpose(x.reshape(B, H * W, C), (1, 0, 2)).reshape(H * W, B * C)
    out = pl.pallas_call(
        _avgpool_kernel,
        out_shape=jax.ShapeDtypeStruct((1, B * C), jnp.float32),
    )(xt)
    return out.reshape(B, C)


# ---------------------------------------------------------------------------
# Deterministic parameter construction (synthetic, no checkpoint)
# ---------------------------------------------------------------------------
class ParamGen:
    def __init__(self, seed):
        self.key = jax.random.PRNGKey(seed)
        self.i = 0

    def _next(self):
        self.i += 1
        return jax.random.fold_in(self.key, self.i)

    def conv(self, o, c, kh, kw):
        fan_in = c * kh * kw
        return (jax.random.normal(self._next(), (o, c, kh, kw), jnp.float32)
                * jnp.sqrt(2.0 / fan_in))

    def bn(self, c):
        # gamma=1, beta=0, running_mean=0, running_var=1 (fresh torch BN, eval)
        eps = 1e-5
        scale = jnp.full((c,), 1.0 / jnp.sqrt(1.0 + eps), jnp.float32)
        bias = jnp.zeros((c,), jnp.float32)
        return scale, bias

    def linear(self, in_f, out_f):
        w = (jax.random.normal(self._next(), (out_f, in_f), jnp.float32)
             * jnp.sqrt(1.0 / in_f))
        b = jax.random.normal(self._next(), (out_f,), jnp.float32) * 0.01
        return w, b


def _fold_conv_weight(w):
    """(O, C, kh, kw) -> bf16 (Kp, O) matrix matching NHWC im2col columns."""
    O, C, kh, kw = w.shape
    K = kh * kw * C
    wm = jnp.transpose(w, (2, 3, 1, 0)).reshape(K, O)
    Kp = K if K % 8 == 0 else _round_up(K, 128)       # only the 7x7 stem pads
    if Kp != K:
        wm = jnp.pad(wm, ((0, Kp - K), (0, 0)))
    return wm.astype(jnp.bfloat16)


def make_params(num_classes, seed=1):
    pg = ParamGen(seed)
    P = {}
    P['conv1_wm'] = _fold_conv_weight(pg.conv(64, 3, 7, 7))
    P['bn1_s'], P['bn1_b'] = pg.bn(64)
    cfgs = [(64, 3, 1), (128, 4, 2), (256, 6, 2), (512, 3, 2)]
    inplanes = 64
    P['layers'] = []
    for planes, blocks, stride in cfgs:
        layer = []
        for bidx in range(blocks):
            s = stride if bidx == 0 else 1
            blk = {'stride': s}
            blk['wm1'] = _fold_conv_weight(pg.conv(planes, inplanes, 1, 1))
            blk['s1'], blk['b1'] = pg.bn(planes)
            blk['wm2'] = _fold_conv_weight(pg.conv(planes, planes, 3, 3))
            blk['s2'], blk['b2'] = pg.bn(planes)
            blk['wm3'] = _fold_conv_weight(pg.conv(planes * 4, planes, 1, 1))
            blk['s3'], blk['b3'] = pg.bn(planes * 4)
            if s != 1 or inplanes != planes * 4:
                blk['wmd'] = _fold_conv_weight(pg.conv(planes * 4, inplanes, 1, 1))
                blk['sd'], blk['bd'] = pg.bn(planes * 4)
            layer.append(blk)
            inplanes = planes * 4
        P['layers'].append(layer)
    # FC layers: pre-transposed bf16 (K, N) weights, unit "scale", f32 bias.
    w1, b1 = pg.linear(2048, 1000)
    w2, b2 = pg.linear(1000, num_classes)
    P['fc1_wm'] = w1.T.astype(jnp.bfloat16)
    P['fc1_s'] = jnp.ones((1000,), jnp.float32)
    P['fc1_b'] = b1
    P['fc2_wm'] = w2.T.astype(jnp.bfloat16)
    P['fc2_s'] = jnp.ones((num_classes,), jnp.float32)
    P['fc2_b'] = b2
    return P


# ---------------------------------------------------------------------------
# Forward pass (matches Model.forward)
# ---------------------------------------------------------------------------
def bottleneck(x, blk):
    s = blk['stride']
    out = conv_bn_act(x, blk['wm1'], blk['s1'], blk['b1'], 1, 1,
                      stride=1, pad=0, relu=True)
    out = conv_bn_act(out, blk['wm2'], blk['s2'], blk['b2'], 3, 3,
                      stride=s, pad=1, relu=True)
    if 'wmd' in blk:
        identity = conv_bn_act(x, blk['wmd'], blk['sd'], blk['bd'], 1, 1,
                               stride=s, pad=0, relu=False)
    else:
        identity = x
    # conv3 with the residual add + final ReLU fused into the GEMM epilogue
    return conv_bn_act(out, blk['wm3'], blk['s3'], blk['b3'], 1, 1,
                       stride=1, pad=0, relu=True, residual=identity)


def forward(P, x_nchw):
    # Single NCHW -> NHWC transpose at the boundary; bf16 activations after.
    x = jnp.transpose(x_nchw, (0, 2, 3, 1)).astype(jnp.bfloat16)
    # ResNet-50 stem
    x = conv_bn_act(x, P['conv1_wm'], P['bn1_s'], P['bn1_b'], 7, 7,
                    stride=2, pad=3, relu=True)
    x = maxpool3x3s2p1(x)
    # layers 1-4
    for layer in P['layers']:
        for blk in layer:
            x = bottleneck(x, blk)
    # AvgPool2d(6, stride=1) on the 6x6 map, then torch.squeeze -> (B, 2048)
    feat = avgpool6_squeeze(x)                       # (B, 2048) f32
    # fc1: Linear(2048, 1000); fc2: Linear(1000, num_classes)
    h = gemm_bn_act(feat, P['fc1_wm'], P['fc1_s'], P['fc1_b'],
                    relu=False, out_dtype=jnp.bfloat16)
    y = gemm_bn_act(h, P['fc2_wm'], P['fc2_s'], P['fc2_b'],
                    relu=False, out_dtype=jnp.float32)
    return y


if __name__ == "__main__":
    num_classes = 10
    # Input spatial size 192 -> backbone output 6x6, matching AvgPool2d(6).
    B, C, H, W = 2, 3, 192, 192
    x = jax.random.normal(jax.random.PRNGKey(0), (B, C, H, W), jnp.float32)

    params = make_params(num_classes, seed=1)
    y = forward(params, x)
    y = jax.block_until_ready(y)

    assert y.shape == (B, num_classes), y.shape
    assert bool(jnp.all(jnp.isfinite(y)))
    print("KERNEL_OK")
</pallas_src>

<mosaic_0001>
module attributes {stable_mosaic.version = 11 : i64} {
  func.func @_gemm_kernel(%arg0: i32, %arg1: i32, %arg2: memref<1024x256xbf16, #tpu.memory_space<vmem>>, %arg3: memref<256x64xbf16, #tpu.memory_space<vmem>>, %arg4: memref<1x64xf32, #tpu.memory_space<vmem>>, %arg5: memref<1x64xf32, #tpu.memory_space<vmem>>, %arg6: memref<1024x64xbf16, #tpu.memory_space<vmem>>) attributes {dimension_semantics = [#tpu.dimension_semantics<parallel>, #tpu.dimension_semantics<parallel>], iteration_bounds = array<i64: 18, 1>, scalar_prefetch = 0 : i64, scratch_operands = 0 : i64, tpu.core_type = #tpu.core_type<tc>, window_params = [{transform_indices = @transform_0, window_bounds = array<i64: 1024, 256>}, {transform_indices = @transform_1, window_bounds = array<i64: 256, 64>}, {transform_indices = @transform_2, window_bounds = array<i64: 1, 64>}, {transform_indices = @transform_3, window_bounds = array<i64: 1, 64>}, {transform_indices = @transform_4, window_bounds = array<i64: 1024, 64>}]} {
    %c0 = arith.constant 0 : index
    %c0_0 = arith.constant 0 : index
    %0 = vector.load %arg2[%c0, %c0_0] : memref<1024x256xbf16, #tpu.memory_space<vmem>>, vector<1024x256xbf16>
    %c0_1 = arith.constant 0 : index
    %c0_2 = arith.constant 0 : index
    %1 = vector.load %arg3[%c0_1, %c0_2] : memref<256x64xbf16, #tpu.memory_space<vmem>>, vector<256x64xbf16>
    %cst = arith.constant dense<0.000000e+00> : vector<1024x64xf32>
    %2 = tpu.matmul %0, %1, %cst {dimension_numbers = #tpu.dot_dimension_numbers<[1], [0], [0], [1], [0, 0, 1, 1], [], []>} : vector<1024x256xbf16>, vector<256x64xbf16>, vector<1024x64xf32> -> vector<1024x64xf32>
    %c0_3 = arith.constant 0 : index
    %c0_4 = arith.constant 0 : index
    %3 = vector.load %arg4[%c0_3, %c0_4] : memref<1x64xf32, #tpu.memory_space<vmem>>, vector<1x64xf32>
    %4 = vector.broadcast %3 : vector<1x64xf32> to vector<1024x64xf32>
    %5 = arith.mulf %2, %4 : vector<1024x64xf32>
    %c0_5 = arith.constant 0 : index
    %c0_6 = arith.constant 0 : index
    %6 = vector.load %arg5[%c0_5, %c0_6] : memref<1x64xf32, #tpu.memory_space<vmem>>, vector<1x64xf32>
    %7 = vector.broadcast %6 : vector<1x64xf32> to vector<1024x64xf32>
    %8 = arith.addf %5, %7 : vector<1024x64xf32>
    %cst_7 = arith.constant 0.000000e+00 : f32
    %9 = vector.broadcast %cst_7 : f32 to vector<1024x64xf32>
    %10 = arith.maximumf %8, %9 : vector<1024x64xf32>
    %11 = arith.truncf %10 : vector<1024x64xf32> to vector<1024x64xbf16>
    %c0_8 = arith.constant 0 : index
    %c0_9 = arith.constant 0 : index
    %12 = vector.load %arg6[%c0_8, %c0_9] : memref<1024x64xbf16, #tpu.memory_space<vmem>>, vector<1024x64xbf16>
    tpu.vector_store %arg6[%c0_8, %c0_9], %11 {strides = array<i32>} : memref<1024x64xbf16, #tpu.memory_space<vmem>>, vector<1024x64xbf16>,
    return
  }
  func.func @transform_0(%arg0: i32, %arg1: i32) -> (i32, i32) {
    %c0_i32 = arith.constant 0 : i32
    %c0_i32_0 = arith.constant 0 : i32
    return %arg0, %c0_i32 : i32, i32
  }
  func.func @transform_1(%arg0: i32, %arg1: i32) -> (i32, i32) {
    %c0_i32 = arith.constant 0 : i32
    %c0_i32_0 = arith.constant 0 : i32
    return %c0_i32, %arg1 : i32, i32
  }
  func.func @transform_2(%arg0: i32, %arg1: i32) -> (i32, i32) {
    %c0_i32 = arith.constant 0 : i32
    %c0_i32_0 = arith.constant 0 : i32
    return %c0_i32, %arg1 : i32, i32
  }
  func.func @transform_3(%arg0: i32, %arg1: i32) -> (i32, i32) {
    %c0_i32 = arith.constant 0 : i32
    %c0_i32_0 = arith.constant 0 : i32
    return %c0_i32, %arg1 : i32, i32
  }
  func.func @transform_4(%arg0: i32, %arg1: i32) -> (i32, i32) {
    %c0_i32 = arith.constant 0 : i32
    return %arg0, %arg1 : i32, i32
  }
}

</mosaic_0001>

<llo_original>
// kernel: tpu_custom_call.1
$region0: #{tpu_custom_call.1}
  #allocation0 [shape = 'u32[]', space=smem, size = 0x4, offset = 0x4, fixed_abs, tag = 'smem constant byte address 0x4 - core index']
  #allocation1 [shape = 'u32[144,128]{1,0:T(1,128)}', space=vmem, size = 0x12000, scoped, tag = 'internal scratch']
  %s0 = inlined_call_operand.hbm [shape: bf16[18432,256], index: 0, kind: input, shape index: {}]
  %s1 = inlined_call_operand.vmem [shape: bf16[256,64], index: 1, kind: input, shape index: {}]
  %s2 = inlined_call_operand.hbm [shape: f32[1,64], index: 2, kind: input, shape index: {}]
  %s3 = inlined_call_operand.hbm [shape: f32[1,64], index: 3, kind: input, shape index: {}]
  %s4 = inlined_call_operand.vmem [shape: bf16[18432,64], index: 4, kind: output, shape index: {}]
  %s5 = sld [smem:[#allocation0]]
  $region61: #{tpu_custom_call.1} parent=0
    _
  %s7 = ssub.s32 1, %s5
  %s8 = scalar_select 0, %s7, %s5
  $region1: #{tpu_custom_call.1} parent=0
    #allocation2 [shape = 'u8[1048576]{0}', space=vmem, size = 0x100000, scoped, tag = 'input window, operand 0']
    #allocation3 [shape = 's32[2]{0}', space=sflag, size = 0x8, scoped, tag = 'scoped memory for tpu_custom_call.1']
    #allocation4 [shape = 'u8[512]{0}', space=vmem, size = 0x400, scoped, tag = 'input window, operand 2, single buffered']
    #allocation5 [shape = 's32[1]{0}', space=sflag, size = 0x4, scoped, tag = 'scoped memory for tpu_custom_call.1']
    #allocation6 [shape = 'u8[512]{0}', space=vmem, size = 0x400, scoped, tag = 'input window, operand 3, single buffered']
    %9 = vsyncpa [#allocation3], 0
    %s10 = scalar_lea.sflag [#allocation3], 1
    %11 = vsyncpa %s10, 0
    %12 = vsyncpa [#allocation5], 0
    loop: start=0, step=1, limit=20
    $region2: #{tpu_custom_call.1} parent=1 // loop_pre_header
      _
    $region3: #{tpu_custom_call.1} parent=1 // loop_header
      %s14 = sphi 0, %s18
      %p15 = scmp.ge.s32.totalorder %s14, 20
      %s21 = sphi 0, %s33
      %s22 = sphi 0, %s29
      %s23 = sphi 0, %s21
      %s24 = sphi 0, %s22
      %s25 = sphi 0, %s23
      %s26 = sphi 0, %s24
      %s36 = sphi 0, %s38
      %s39 = sphi 0, %s36
      %s40 = sphi 0, %s39
      %s56 = sphi 0, %s40
      %s62 = sphi 0, %s64
      %s65 = sphi 0, %s62
      %s66 = sphi 0, %s65
      %s82 = sphi 0, %s66
      %s88 = sphi 0, %s90
      %s91 = sphi 0, %s88
      %s92 = sphi 0, %s91
      %s108 = sphi 0, %s92
      %s114 = sphi 0, %s116
      %s117 = sphi 0, %s114
      %s118 = sphi 0, %s117
      %s134 = sphi 0, %s118
      %s142 = sphi 0, %s144
      %s145 = sphi 0, %s142
      %s146 = sphi 0, %s145
      %s162 = sphi 0, %s146
    $region4: #{tpu_custom_call.1} parent=1 // loop_header_branch
      %17 = sbr.rel (%p15) target = $region8
    $region5: #{tpu_custom_call.1} parent=1 // loop_body
      %s19 = ssub.s32 %s14, 1
      %s20 = ssub.s32 %s14, 2
      %s27 = sadd.s32 1, %s22
      %p28 = scmp.ge.s32.totalorder %s27, 1
      %s29 = scalar_select %p28, 0, %s27
      %s30 = sadd.s32 1, %s21
      %s31 = scalar_select %p28, %s30, %s21
      %p32 = scmp.ge.s32.totalorder %s31, 18
      %s33 = scalar_select %p32, 0, %s31
      %s34 = ssub.s32 %s21, %s33
      %p35 = scmp.eq.s32.totalorder %s34, 0
      %s37 = sadd.s32 %s36, 1
      %s38 = scalar_select %p35, %s36, %s37
      %p41 = pneg %p35
      %p42 = scmp.eq.s32.totalorder %s14, 17
      %p43 = por %p41, %p42
      %p44 = scmp.ne.s32.totalorder %s36, %s39
      %p45 = scmp.eq.s32.totalorder %s14, 0
      %p46 = por %p44, %p45
      %p47 = scmp.ne.s32.totalorder %s36, %s39
      %p48 = scmp.eq.s32.totalorder %s19, 17
      %p49 = por %p47, %p48
      %p50 = scmp.ne.s32.totalorder %s39, %s40
      %p51 = scmp.eq.s32.totalorder %s19, 0
      %p52 = por %p50, %p51
      %p53 = scmp.ne.s32.totalorder %s39, %s40
      %p54 = scmp.eq.s32.totalorder %s20, 17
      %p55 = por %p53, %p54
      %p57 = scmp.ne.s32.totalorder %s40, %s56
      %p58 = scmp.eq.s32.totalorder %s20, 0
      %p59 = por %p57, %p58
      %s60 = ssub.s32 %s22, %s29
      %p61 = scmp.eq.s32.totalorder %s60, 0
      %s63 = sadd.s32 %s62, 1
      %s64 = scalar_select %p61, %s62, %s63
      %p67 = pneg %p61
      %p68 = scmp.eq.s32.totalorder %s14, 17
      %p69 = por %p67, %p68
      %p70 = scmp.ne.s32.totalorder %s62, %s65
      %p71 = scmp.eq.s32.totalorder %s14, 0
      %p72 = por %p70, %p71
      %p73 = scmp.ne.s32.totalorder %s62, %s65
      %p74 = scmp.eq.s32.totalorder %s19, 17
      %p75 = por %p73, %p74
      %p76 = scmp.ne.s32.totalorder %s65, %s66
      %p77 = scmp.eq.s32.totalorder %s19, 0
      %p78 = por %p76, %p77
      %p79 = scmp.ne.s32.totalorder %s65, %s66
      %p80 = scmp.eq.s32.totalorder %s20, 17
      %p81 = por %p79, %p80
      %p83 = scmp.ne.s32.totalorder %s66, %s82
      %p84 = scmp.eq.s32.totalorder %s20, 0
      %p85 = por %p83, %p84
      %s86 = ssub.s32 %s22, %s29
      %p87 = scmp.eq.s32.totalorder %s86, 0
      %s89 = sadd.s32 %s88, 1
      %s90 = scalar_select %p87, %s88, %s89
      %p93 = pneg %p87
      %p94 = scmp.eq.s32.totalorder %s14, 17
      %p95 = por %p93, %p94
      %p96 = scmp.ne.s32.totalorder %s88, %s91
      %p97 = scmp.eq.s32.totalorder %s14, 0
      %p98 = por %p96, %p97
      %p99 = scmp.ne.s32.totalorder %s88, %s91
      %p100 = scmp.eq.s32.totalorder %s19, 17
      %p101 = por %p99, %p100
      %p102 = scmp.ne.s32.totalorder %s91, %s92
      %p103 = scmp.eq.s32.totalorder %s19, 0
      %p104 = por %p102, %p103
      %p105 = scmp.ne.s32.totalorder %s91, %s92
      %p106 = scmp.eq.s32.totalorder %s20, 17
      %p107 = por %p105, %p106
      %p109 = scmp.ne.s32.totalorder %s92, %s108
      %p110 = scmp.eq.s32.totalorder %s20, 0
      %p111 = por %p109, %p110
      %s112 = ssub.s32 %s22, %s29
      %p113 = scmp.eq.s32.totalorder %s112, 0
      %s115 = sadd.s32 %s114, 1
      %s116 = scalar_select %p113, %s114, %s115
      %p119 = pneg %p113
      %p120 = scmp.eq.s32.totalorder %s14, 17
      %p121 = por %p119, %p120
      %p122 = scmp.ne.s32.totalorder %s114, %s117
      %p123 = scmp.eq.s32.totalorder %s14, 0
      %p124 = por %p122, %p123
      %p125 = scmp.ne.s32.totalorder %s114, %s117
      %p126 = scmp.eq.s32.totalorder %s19, 17
      %p127 = por %p125, %p126
      %p128 = scmp.ne.s32.totalorder %s117, %s118
      %p129 = scmp.eq.s32.totalorder %s19, 0
      %p130 = por %p128, %p129
      %p131 = scmp.ne.s32.totalorder %s117, %s118
      %p132 = scmp.eq.s32.totalorder %s20, 17
      %p133 = por %p131, %p132
      %p135 = scmp.ne.s32.totalorder %s118, %s134
      %p136 = scmp.eq.s32.totalorder %s20, 0
      %p137 = por %p135, %p136
      %s138 = ssub.s32 %s21, %s33
      %s139 = ssub.s32 %s22, %s29
      %s140 = sor.u32 %s138, %s139
      %p141 = scmp.eq.s32.totalorder %s140, 0
      %s143 = sadd.s32 %s142, 1
      %s144 = scalar_select %p141, %s142, %s143
      %p147 = pneg %p141
      %p148 = scmp.eq.s32.totalorder %s14, 17
      %p149 = por %p147, %p148
      %p150 = scmp.ne.s32.totalorder %s142, %s145
      %p151 = scmp.eq.s32.totalorder %s14, 0
      %p152 = por %p150, %p151
      %p153 = scmp.ne.s32.totalorder %s142, %s145
      %p154 = scmp.eq.s32.totalorder %s19, 17
      %p155 = por %p153, %p154
      %p156 = scmp.ne.s32.totalorder %s145, %s146
      %p157 = scmp.eq.s32.totalorder %s19, 0
      %p158 = por %p156, %p157
      %p159 = scmp.ne.s32.totalorder %s145, %s146
      %p160 = scmp.eq.s32.totalorder %s20, 17
      %p161 = por %p159, %p160
      %p163 = scmp.ne.s32.totalorder %s146, %s162
      %p164 = scmp.eq.s32.totalorder %s20, 0
      %p165 = por %p163, %p164
      %p166 = scmp.le.s32.totalorder 1, %s14
      %p167 = scmp.lt.s32.totalorder %s14, 19
      %p168 = pnand %p166, %p167
      %p169 = pneg %p168
      // Predicated region
      $region9: #{tpu_custom_call.1} parent=5 // pred_check
        _
      $region10: #{tpu_custom_call.1} parent=5 // pred_check_branch
        %171 = sbr.rel (%p168) target = $region12
      $region11: #{tpu_custom_call.1} parent=5 // pred_region
        %s172 = ssub.s32 %s14, 1
        // Predicated region
        $region13: #{tpu_custom_call.1} parent=11 // pred_check
          %p173 = pneg %p78
        $region14: #{tpu_custom_call.1} parent=11 // pred_check_branch
          %175 = sbr.rel (%p173) target = $region16
        $region15: #{tpu_custom_call.1} parent=11 // pred_region
          %p176 = scmp.lt.s32.totalorder %s24, 0
          %s177 = scalar_select %p176, %s24, 0
          %s178 = smul.addr %s177, 4
          %s179 = scalar_lea.vmem %s1, %s178
        $region16: #{tpu_custom_call.1} parent=11 // pred_fallthru
          _
        // Predicated region
        $region17: #{tpu_custom_call.1} parent=11 // pred_check
          %p180 = pneg %p104
        $region18: #{tpu_custom_call.1} parent=11 // pred_check_branch
          %182 = sbr.rel (%p180) target = $region20
        $region19: #{tpu_custom_call.1} parent=11 // pred_region
          %s184 = ssub.s32 16, 16
          %185 = vsyncadd [#allocation5], %s184
          %s186 = smul.addr %s24, 16
          %s187 = scalar_lea.hbm %s2, %s186
          %s189 = sshll.u32 [#allocation4], 4
          %s190 = int_to_ptr.vmem [resolvable:$true] %s189
          %192 = dma.hbm_to_vmem [thread:$0]  %s187, 16, %s190, [#allocation5]
        $region20: #{tpu_custom_call.1} parent=11 // pred_fallthru
          _
        // Predicated region
        $region21: #{tpu_custom_call.1} parent=11 // pred_check
          %p193 = pneg %p130
        $region22: #{tpu_custom_call.1} parent=11 // pred_check_branch
          %195 = sbr.rel (%p193) target = $region24
        $region23: #{tpu_custom_call.1} parent=11 // pred_region
          %s197 = ssub.s32 16, 16
          %198 = vsyncadd [#allocation5], %s197
          %s199 = smul.addr %s24, 16
          %s200 = scalar_lea.hbm %s3, %s199
          %s202 = sshll.u32 [#allocation6], 4
          %s203 = int_to_ptr.vmem [resolvable:$true] %s202
          %205 = dma.hbm_to_vmem [thread:$0]  %s200, 16, %s203, [#allocation5]
        $region24: #{tpu_custom_call.1} parent=11 // pred_fallthru
          _
      $region12: #{tpu_custom_call.1} parent=5 // pred_fallthru
        _
      %p206 = scmp.lt.s32.totalorder %s14, 18
      // Predicated region
      $region25: #{tpu_custom_call.1} parent=5 // pred_check
        %p207 = pneg %p206
      $region26: #{tpu_custom_call.1} parent=5 // pred_check_branch
        %209 = sbr.rel (%p207) target = $region28
      $region27: #{tpu_custom_call.1} parent=5 // pred_region
        // Predicated region
        $region29: #{tpu_custom_call.1} parent=27 // pred_check
          %p210 = pneg %p46
        $region30: #{tpu_custom_call.1} parent=27 // pred_check_branch
          %212 = sbr.rel (%p210) target = $region32
        $region31: #{tpu_custom_call.1} parent=27 // pred_region
          %s213 = sand.u32 %s36, 1
          %s214 = scalar_lea.sflag [#allocation3], %s213
          %s215 = sand.u32 %s36, 1
          %s216 = smul.addr %s215, 1024
          %s217 = scalar_lea.vmem [#allocation2], %s216
          %s218 = smul.u32 128, %s21
          %s220 = ssub.s32 16384, 16384
          %221 = vsyncadd %s214, %s220
          %s222 = smul.addr %s218, 2
          %s223 = smul.addr %s222, 64
          %s224 = scalar_lea.hbm %s0, %s223
          %s225 = sshll.u32 %s217, 4
          %s226 = int_to_ptr.vmem [resolvable:$true] %s225
          %231 = dma.hbm_to_vmem [thread:$0]  %s224, 16384, %s226, %s214, 128, 128, 8
        $region32: #{tpu_custom_call.1} parent=27 // pred_fallthru
          _
      $region28: #{tpu_custom_call.1} parent=5 // pred_fallthru
        _
      %p232 = scmp.le.s32.totalorder 1, %s14
      %p233 = scmp.lt.s32.totalorder %s14, 19
      %p234 = pnand %p232, %p233
      %p235 = pneg %p234
      // Predicated region
      $region33: #{tpu_custom_call.1} parent=5 // pred_check
        _
      $region34: #{tpu_custom_call.1} parent=5 // pred_check_branch
        %237 = sbr.rel (%p234) target = $region36
      $region35: #{tpu_custom_call.1} parent=5 // pred_region
        %s238 = ssub.s32 %s14, 1
        %s239 = sand.u32 %s39, 1
        %s240 = scalar_lea.sflag [#allocation3], %s239
        %s241 = sand.u32 %s39, 1
        %s242 = smul.addr %s241, 1024
        %s243 = scalar_lea.vmem [#allocation2], %s242
        // Predicated region
        $region37: #{tpu_custom_call.1} parent=35 // pred_check
          %p244 = pneg %p52
        $region38: #{tpu_custom_call.1} parent=35 // pred_check_branch
          %246 = sbr.rel (%p244) target = $region40
        $region39: #{tpu_custom_call.1} parent=35 // pred_region
          %247 = dma.done %s240, 16384
        $region40: #{tpu_custom_call.1} parent=35 // pred_fallthru
          _
        // Predicated region
        $region41: #{tpu_custom_call.1} parent=35 // pred_check
          %p248 = pneg %p104
        $region42: #{tpu_custom_call.1} parent=35 // pred_check_branch
          %250 = sbr.rel (%p248) target = $region44
        $region43: #{tpu_custom_call.1} parent=35 // pred_region
          %251 = dma.done [#allocation5], 16
        $region44: #{tpu_custom_call.1} parent=35 // pred_fallthru
          _
        // Predicated region
        $region45: #{tpu_custom_call.1} parent=35 // pred_check
          %p252 = pneg %p130
        $region46: #{tpu_custom_call.1} parent=35 // pred_check_branch
          %254 = sbr.rel (%p252) target = $region48
        $region47: #{tpu_custom_call.1} parent=35 // pred_region
          %255 = dma.done [#allocation5], 16
        $region48: #{tpu_custom_call.1} parent=35 // pred_fallthru
          _
        %s256 = sand.u32 %s39, 1
        %s257 = scalar_lea.sflag [#allocation3], %s256
        %s258 = sand.u32 %s39, 1
        %s259 = smul.addr %s258, 1024
        %s260 = scalar_lea.vmem [#allocation2], %s259
        %p261 = pneg %p52
        %p262 = pneg %p49
        %p263 = scmp.lt.s32.totalorder %s24, 0
        %s264 = scalar_select %p263, %s24, 0
        %s265 = smul.addr %s264, 4
        %s266 = scalar_lea.vmem %s1, %s265
        %p267 = pneg %p78
        %p268 = pneg %p75
        %p269 = pneg %p104
        %p270 = pneg %p101
        %p271 = pneg %p130
        %p272 = pneg %p127
        %p273 = pneg %p158
        %p274 = pneg %p155
        %s275 = smul.u32 128, %s23
        %p276 = scmp.lt.s32.totalorder %s275, 2303
        %s277 = scalar_select %p276, %s275, 2303
        %p278 = scmp.lt.s32.totalorder %s24, 0
        %s279 = scalar_select %p278, %s24, 0
        %s280 = sadd.s32 %s279, %s277
        %s281 = smul.addr %s280, 4
        %s282 = scalar_lea.vmem %s4, %s281
        %s283 = smul.u32 128, %s23
        %p284 = scmp.lt.s32.totalorder %s24, 0
        %s285 = scalar_select %p284, %s24, 0
        %s286 = smul.addr %s285, 4
        %s287 = scalar_lea.vmem %s1, %s286
        %s288 = smul.u32 128, %s23
        %p289 = scmp.lt.s32.totalorder %s288, 2303
        %s290 = scalar_select %p289, %s288, 2303
        %p291 = scmp.lt.s32.totalorder %s24, 0
        %s292 = scalar_select %p291, %s24, 0
        %s293 = sadd.s32 %s292, %s290
        %s294 = smul.addr %s293, 4
        %s295 = scalar_lea.vmem %s4, %s294
        %s296 = smul.u32 128, %s23
        %v298 = vld [vmem:[%s243] sm:$0xff]
        %v299 = vld [vmem:[%s243 + $0x8] sm:$0xff]
        %v300 = vld [vmem:[%s243 + $0x10] sm:$0xff]
        %v301 = vld [vmem:[%s243 + $0x18] sm:$0xff]
        %v302 = vld [vmem:[%s243 + $0x20] sm:$0xff]
        %v303 = vld [vmem:[%s243 + $0x28] sm:$0xff]
        %v304 = vld [vmem:[%s243 + $0x30] sm:$0xff]
        %v305 = vld [vmem:[%s243 + $0x38] sm:$0xff]
        %v306 = vld [vmem:[%s243 + $0x40] sm:$0xff]
        %v307 = vld [vmem:[%s243 + $0x48] sm:$0xff]
        %v308 = vld [vmem:[%s243 + $0x50] sm:$0xff]
        %v309 = vld [vmem:[%s243 + $0x58] sm:$0xff]
        %v310 = vld [vmem:[%s243 + $0x60] sm:$0xff]
        %v311 = vld [vmem:[%s243 + $0x68] sm:$0xff]
        %v312 = vld [vmem:[%s243 + $0x70] sm:$0xff]
        %v313 = vld [vmem:[%s243 + $0x78] sm:$0xff]
        %v314 = vld [vmem:[%s243 + $0x80] sm:$0xff]
        %v315 = vld [vmem:[%s243 + $0x88] sm:$0xff]
        %v316 = vld [vmem:[%s243 + $0x90] sm:$0xff]
        %v317 = vld [vmem:[%s243 + $0x98] sm:$0xff]
        %v318 = vld [vmem:[%s243 + $0xa0] sm:$0xff]
        %v319 = vld [vmem:[%s243 + $0xa8] sm:$0xff]
        %v320 = vld [vmem:[%s243 + $0xb0] sm:$0xff]
        %v321 = vld [vmem:[%s243 + $0xb8] sm:$0xff]
        %v322 = vld [vmem:[%s243 + $0xc0] sm:$0xff]
        %v323 = vld [vmem:[%s243 + $0xc8] sm:$0xff]
        %v324 = vld [vmem:[%s243 + $0xd0] sm:$0xff]
        %v325 = vld [vmem:[%s243 + $0xd8] sm:$0xff]
        %v326 = vld [vmem:[%s243 + $0xe0] sm:$0xff]
        %v327 = vld [vmem:[%s243 + $0xe8] sm:$0xff]
        %v328 = vld [vmem:[%s243 + $0xf0] sm:$0xff]
        %v329 = vld [vmem:[%s243 + $0xf8] sm:$0xff]
        %v330 = vld [vmem:[%s243 + $0x100] sm:$0xff]
        %v331 = vld [vmem:[%s243 + $0x108] sm:$0xff]
        %v332 = vld [vmem:[%s243 + $0x110] sm:$0xff]
        %v333 = vld [vmem:[%s243 + $0x118] sm:$0xff]
        %v334 = vld [vmem:[%s243 + $0x120] sm:$0xff]
        %v335 = vld [vmem:[%s243 + $0x128] sm:$0xff]
        %v336 = vld [vmem:[%s243 + $0x130] sm:$0xff]
        %v337 = vld [vmem:[%s243 + $0x138] sm:$0xff]
        %v338 = vld [vmem:[%s243 + $0x140] sm:$0xff]
        %v339 = vld [vmem:[%s243 + $0x148] sm:$0xff]
        %v340 = vld [vmem:[%s243 + $0x150] sm:$0xff]
        %v341 = vld [vmem:[%s243 + $0x158] sm:$0xff]
        %v342 = vld [vmem:[%s243 + $0x160] sm:$0xff]
        %v343 = vld [vmem:[%s243 + $0x168] sm:$0xff]
        %v344 = vld [vmem:[%s243 + $0x170] sm:$0xff]
        %v345 = vld [vmem:[%s243 + $0x178] sm:$0xff]
        %v346 = vld [vmem:[%s243 + $0x180] sm:$0xff]
        %v347 = vld [vmem:[%s243 + $0x188] sm:$0xff]
        %v348 = vld [vmem:[%s243 + $0x190] sm:$0xff]
        %v349 = vld [vmem:[%s243 + $0x198] sm:$0xff]
        %v350 = vld [vmem:[%s243 + $0x1a0] sm:$0xff]
        %v351 = vld [vmem:[%s243 + $0x1a8] sm:$0xff]
        %v352 = vld [vmem:[%s243 + $0x1b0] sm:$0xff]
        %v353 = vld [vmem:[%s243 + $0x1b8] sm:$0xff]
        %v354 = vld [vmem:[%s243 + $0x1c0] sm:$0xff]
        %v355 = vld [vmem:[%s243 + $0x1c8] sm:$0xff]
        %v356 = vld [vmem:[%s243 + $0x1d0] sm:$0xff]
        %v357 = vld [vmem:[%s243 + $0x1d8] sm:$0xff]
        %v358 = vld [vmem:[%s243 + $0x1e0] sm:$0xff]
        %v359 = vld [vmem:[%s243 + $0x1e8] sm:$0xff]
        %v360 = vld [vmem:[%s243 + $0x1f0] sm:$0xff]
        %v361 = vld [vmem:[%s243 + $0x1f8] sm:$0xff]
        %v362 = vld [vmem:[%s243 + $0x200] sm:$0xff]
        %v363 = vld [vmem:[%s243 + $0x208] sm:$0xff]
        %v364 = vld [vmem:[%s243 + $0x210] sm:$0xff]
        %v365 = vld [vmem:[%s243 + $0x218] sm:$0xff]
        %v366 = vld [vmem:[%s243 + $0x220] sm:$0xff]
        %v367 = vld [vmem:[%s243 + $0x228] sm:$0xff]
        %v368 = vld [vmem:[%s243 + $0x230] sm:$0xff]
        %v369 = vld [vmem:[%s243 + $0x238] sm:$0xff]
        %v370 = vld [vmem:[%s243 + $0x240] sm:$0xff]
        %v371 = vld [vmem:[%s243 + $0x248] sm:$0xff]
        %v372 = vld [vmem:[%s243 + $0x250] sm:$0xff]
        %v373 = vld [vmem:[%s243 + $0x258] sm:$0xff]
        %v374 = vld [vmem:[%s243 + $0x260] sm:$0xff]
        %v375 = vld [vmem:[%s243 + $0x268] sm:$0xff]
        %v376 = vld [vmem:[%s243 + $0x270] sm:$0xff]
        %v377 = vld [vmem:[%s243 + $0x278] sm:$0xff]
        %v378 = vld [vmem:[%s243 + $0x280] sm:$0xff]
        %v379 = vld [vmem:[%s243 + $0x288] sm:$0xff]
        %v380 = vld [vmem:[%s243 + $0x290] sm:$0xff]
        %v381 = vld [vmem:[%s243 + $0x298] sm:$0xff]
        %v382 = vld [vmem:[%s243 + $0x2a0] sm:$0xff]
        %v383 = vld [vmem:[%s243 + $0x2a8] sm:$0xff]
        %v384 = vld [vmem:[%s243 + $0x2b0] sm:$0xff]
        %v385 = vld [vmem:[%s243 + $0x2b8] sm:$0xff]
        %v386 = vld [vmem:[%s243 + $0x2c0] sm:$0xff]
        %v387 = vld [vmem:[%s243 + $0x2c8] sm:$0xff]
        %v388 = vld [vmem:[%s243 + $0x2d0] sm:$0xff]
        %v389 = vld [vmem:[%s243 + $0x2d8] sm:$0xff]
        %v390 = vld [vmem:[%s243 + $0x2e0] sm:$0xff]
        %v391 = vld [vmem:[%s243 + $0x2e8] sm:$0xff]
        %v392 = vld [vmem:[%s243 + $0x2f0] sm:$0xff]
        %v393 = vld [vmem:[%s243 + $0x2f8] sm:$0xff]
        %v394 = vld [vmem:[%s243 + $0x300] sm:$0xff]
        %v395 = vld [vmem:[%s243 + $0x308] sm:$0xff]
        %v396 = vld [vmem:[%s243 + $0x310] sm:$0xff]
        %v397 = vld [vmem:[%s243 + $0x318] sm:$0xff]
        %v398 = vld [vmem:[%s243 + $0x320] sm:$0xff]
        %v399 = vld [vmem:[%s243 + $0x328] sm:$0xff]
        %v400 = vld [vmem:[%s243 + $0x330] sm:$0xff]
        %v401 = vld [vmem:[%s243 + $0x338] sm:$0xff]
        %v402 = vld [vmem:[%s243 + $0x340] sm:$0xff]
        %v403 = vld [vmem:[%s243 + $0x348] sm:$0xff]
        %v404 = vld [vmem:[%s243 + $0x350] sm:$0xff]
        %v405 = vld [vmem:[%s243 + $0x358] sm:$0xff]
        %v406 = vld [vmem:[%s243 + $0x360] sm:$0xff]
        %v407 = vld [vmem:[%s243 + $0x368] sm:$0xff]
        %v408 = vld [vmem:[%s243 + $0x370] sm:$0xff]
        %v409 = vld [vmem:[%s243 + $0x378] sm:$0xff]
        %v410 = vld [vmem:[%s243 + $0x380] sm:$0xff]
        %v411 = vld [vmem:[%s243 + $0x388] sm:$0xff]
        %v412 = vld [vmem:[%s243 + $0x390] sm:$0xff]
        %v413 = vld [vmem:[%s243 + $0x398] sm:$0xff]
        %v414 = vld [vmem:[%s243 + $0x3a0] sm:$0xff]
        %v415 = vld [vmem:[%s243 + $0x3a8] sm:$0xff]
        %v416 = vld [vmem:[%s243 + $0x3b0] sm:$0xff]
        %v417 = vld [vmem:[%s243 + $0x3b8] sm:$0xff]
        %v418 = vld [vmem:[%s243 + $0x3c0] sm:$0xff]
        %v419 = vld [vmem:[%s243 + $0x3c8] sm:$0xff]
        %v420 = vld [vmem:[%s243 + $0x3d0] sm:$0xff]
        %v421 = vld [vmem:[%s243 + $0x3d8] sm:$0xff]
        %v422 = vld [vmem:[%s243 + $0x3e0] sm:$0xff]
        %v423 = vld [vmem:[%s243 + $0x3e8] sm:$0xff]
        %v424 = vld [vmem:[%s243 + $0x3f0] sm:$0xff]
        %v425 = vld [vmem:[%s243 + $0x3f8] sm:$0xff]
        %v426 = vld [vmem:[%s287] sm:$0xf]
        %v427 = vld [vmem:[%s287 + $0x4] sm:$0xf]
        %v428 = vld [vmem:[%s287 + $0x8] sm:$0xf]
        %v429 = vld [vmem:[%s287 + $0xc] sm:$0xf]
        %v430 = vld [vmem:[%s287 + $0x10] sm:$0xf]
        %v431 = vld [vmem:[%s287 + $0x14] sm:$0xf]
        %v432 = vld [vmem:[%s287 + $0x18] sm:$0xf]
        %v433 = vld [vmem:[%s287 + $0x1c] sm:$0xf]
        %v434 = vld [vmem:[%s287 + $0x20] sm:$0xf]
        %v435 = vld [vmem:[%s287 + $0x24] sm:$0xf]
        %v436 = vld [vmem:[%s287 + $0x28] sm:$0xf]
        %v437 = vld [vmem:[%s287 + $0x2c] sm:$0xf]
        %v438 = vld [vmem:[%s287 + $0x30] sm:$0xf]
        %v439 = vld [vmem:[%s287 + $0x34] sm:$0xf]
        %v440 = vld [vmem:[%s287 + $0x38] sm:$0xf]
        %v441 = vld [vmem:[%s287 + $0x3c] sm:$0xf]
        %v442 = vld [vmem:[%s287 + $0x40] sm:$0xf]
        %v443 = vld [vmem:[%s287 + $0x44] sm:$0xf]
        %v444 = vld [vmem:[%s287 + $0x48] sm:$0xf]
        %v445 = vld [vmem:[%s287 + $0x4c] sm:$0xf]
        %v446 = vld [vmem:[%s287 + $0x50] sm:$0xf]
        %v447 = vld [vmem:[%s287 + $0x54] sm:$0xf]
        %v448 = vld [vmem:[%s287 + $0x58] sm:$0xf]
        %v449 = vld [vmem:[%s287 + $0x5c] sm:$0xf]
        %v450 = vld [vmem:[%s287 + $0x60] sm:$0xf]
        %v451 = vld [vmem:[%s287 + $0x64] sm:$0xf]
        %v452 = vld [vmem:[%s287 + $0x68] sm:$0xf]
        %v453 = vld [vmem:[%s287 + $0x6c] sm:$0xf]
        %v454 = vld [vmem:[%s287 + $0x70] sm:$0xf]
        %v455 = vld [vmem:[%s287 + $0x74] sm:$0xf]
        %v456 = vld [vmem:[%s287 + $0x78] sm:$0xf]
        %v457 = vld [vmem:[%s287 + $0x7c] sm:$0xf]
        %v586 = vunpack.c.l.b16 %v298
        %v587 = vunpack.c.h.b16 %v298
        %v588 = vunpack.c.l.b16 %v299
        %v589 = vunpack.c.h.b16 %v299
        %v590 = vunpack.c.l.b16 %v300
        %v591 = vunpack.c.h.b16 %v300
        %v592 = vunpack.c.l.b16 %v301
        %v593 = vunpack.c.h.b16 %v301
        %v594 = vunpack.c.l.b16 %v302
        %v595 = vunpack.c.h.b16 %v302
        %v596 = vunpack.c.l.b16 %v303
        %v597 = vunpack.c.h.b16 %v303
        %v598 = vunpack.c.l.b16 %v304
        %v599 = vunpack.c.h.b16 %v304
        %v600 = vunpack.c.l.b16 %v305
        %v601 = vunpack.c.h.b16 %v305
        %v602 = vunpack.c.l.b16 %v306
        %v603 = vunpack.c.h.b16 %v306
        %v604 = vunpack.c.l.b16 %v307
        %v605 = vunpack.c.h.b16 %v307
        %v606 = vunpack.c.l.b16 %v308
        %v607 = vunpack.c.h.b16 %v308
        %v608 = vunpack.c.l.b16 %v309
        %v609 = vunpack.c.h.b16 %v309
        %v610 = vunpack.c.l.b16 %v310
        %v611 = vunpack.c.h.b16 %v310
        %v612 = vunpack.c.l.b16 %v311
        %v613 = vunpack.c.h.b16 %v311
        %v614 = vunpack.c.l.b16 %v312
        %v615 = vunpack.c.h.b16 %v312
        %v616 = vunpack.c.l.b16 %v313
        %v617 = vunpack.c.h.b16 %v313
        %v618 = vunpack.c.l.b16 %v314
        %v619 = vunpack.c.h.b16 %v314
        %v620 = vunpack.c.l.b16 %v315
        %v621 = vunpack.c.h.b16 %v315
        %v622 = vunpack.c.l.b16 %v316
        %v623 = vunpack.c.h.b16 %v316
        %v624 = vunpack.c.l.b16 %v317
        %v625 = vunpack.c.h.b16 %v317
        %v626 = vunpack.c.l.b16 %v318
        %v627 = vunpack.c.h.b16 %v318
        %v628 = vunpack.c.l.b16 %v319
        %v629 = vunpack.c.h.b16 %v319
        %v630 = vunpack.c.l.b16 %v320
        %v631 = vunpack.c.h.b16 %v320
        %v632 = vunpack.c.l.b16 %v321
        %v633 = vunpack.c.h.b16 %v321
        %v634 = vunpack.c.l.b16 %v322
        %v635 = vunpack.c.h.b16 %v322
        %v636 = vunpack.c.l.b16 %v323
        %v637 = vunpack.c.h.b16 %v323
        %v638 = vunpack.c.l.b16 %v324
        %v639 = vunpack.c.h.b16 %v324
        %v640 = vunpack.c.l.b16 %v325
        %v641 = vunpack.c.h.b16 %v325
        %v642 = vunpack.c.l.b16 %v326
        %v643 = vunpack.c.h.b16 %v326
        %v644 = vunpack.c.l.b16 %v327
        %v645 = vunpack.c.h.b16 %v327
        %v646 = vunpack.c.l.b16 %v328
        %v647 = vunpack.c.h.b16 %v328
        %v648 = vunpack.c.l.b16 %v329
        %v649 = vunpack.c.h.b16 %v329
        %v650 = vunpack.c.l.b16 %v330
        %v651 = vunpack.c.h.b16 %v330
        %v652 = vunpack.c.l.b16 %v331
        %v653 = vunpack.c.h.b16 %v331
        %v654 = vunpack.c.l.b16 %v332
        %v655 = vunpack.c.h.b16 %v332
        %v656 = vunpack.c.l.b16 %v333
        %v657 = vunpack.c.h.b16 %v333
        %v658 = vunpack.c.l.b16 %v334
        %v659 = vunpack.c.h.b16 %v334
        %v660 = vunpack.c.l.b16 %v335
        %v661 = vunpack.c.h.b16 %v335
        %v662 = vunpack.c.l.b16 %v336
        %v663 = vunpack.c.h.b16 %v336
        %v664 = vunpack.c.l.b16 %v337
        %v665 = vunpack.c.h.b16 %v337
        %v666 = vunpack.c.l.b16 %v338
        %v667 = vunpack.c.h.b16 %v338
        %v668 = vunpack.c.l.b16 %v339
        %v669 = vunpack.c.h.b16 %v339
        %v670 = vunpack.c.l.b16 %v340
        %v671 = vunpack.c.h.b16 %v340
        %v672 = vunpack.c.l.b16 %v341
        %v673 = vunpack.c.h.b16 %v341
        %v674 = vunpack.c.l.b16 %v342
        %v675 = vunpack.c.h.b16 %v342
        %v676 = vunpack.c.l.b16 %v343
        %v677 = vunpack.c.h.b16 %v343
        %v678 = vunpack.c.l.b16 %v344
        %v679 = vunpack.c.h.b16 %v344
        %v680 = vunpack.c.l.b16 %v345
        %v681 = vunpack.c.h.b16 %v345
        %v682 = vunpack.c.l.b16 %v346
        %v683 = vunpack.c.h.b16 %v346
        %v684 = vunpack.c.l.b16 %v347
        %v685 = vunpack.c.h.b16 %v347
        %v686 = vunpack.c.l.b16 %v348
        %v687 = vunpack.c.h.b16 %v348
        %v688 = vunpack.c.l.b16 %v349
        %v689 = vunpack.c.h.b16 %v349
        %v690 = vunpack.c.l.b16 %v350
        %v691 = vunpack.c.h.b16 %v350
        %v692 = vunpack.c.l.b16 %v351
        %v693 = vunpack.c.h.b16 %v351
        %v694 = vunpack.c.l.b16 %v352
        %v695 = vunpack.c.h.b16 %v352
        %v696 = vunpack.c.l.b16 %v353
        %v697 = vunpack.c.h.b16 %v353
        %v698 = vunpack.c.l.b16 %v354
        %v699 = vunpack.c.h.b16 %v354
        %v700 = vunpack.c.l.b16 %v355
        %v701 = vunpack.c.h.b16 %v355
        %v702 = vunpack.c.l.b16 %v356
        %v703 = vunpack.c.h.b16 %v356
        %v704 = vunpack.c.l.b16 %v357
        %v705 = vunpack.c.h.b16 %v357
        %v706 = vunpack.c.l.b16 %v358
        %v707 = vunpack.c.h.b16 %v358
        %v708 = vunpack.c.l.b16 %v359
        %v709 = vunpack.c.h.b16 %v359
        %v710 = vunpack.c.l.b16 %v360
        %v711 = vunpack.c.h.b16 %v360
        %v712 = vunpack.c.l.b16 %v361
        %v713 = vunpack.c.h.b16 %v361
        %v714 = vunpack.c.l.b16 %v362
        %v715 = vunpack.c.h.b16 %v362
        %v716 = vunpack.c.l.b16 %v363
        %v717 = vunpack.c.h.b16 %v363
        %v718 = vunpack.c.l.b16 %v364
        %v719 = vunpack.c.h.b16 %v364
        %v720 = vunpack.c.l.b16 %v365
        %v721 = vunpack.c.h.b16 %v365
        %v722 = vunpack.c.l.b16 %v366
        %v723 = vunpack.c.h.b16 %v366
        %v724 = vunpack.c.l.b16 %v367
        %v725 = vunpack.c.h.b16 %v367
        %v726 = vunpack.c.l.b16 %v368
        %v727 = vunpack.c.h.b16 %v368
        %v728 = vunpack.c.l.b16 %v369
        %v729 = vunpack.c.h.b16 %v369
        %v730 = vunpack.c.l.b16 %v370
        %v731 = vunpack.c.h.b16 %v370
        %v732 = vunpack.c.l.b16 %v371
        %v733 = vunpack.c.h.b16 %v371
        %v734 = vunpack.c.l.b16 %v372
        %v735 = vunpack.c.h.b16 %v372
        %v736 = vunpack.c.l.b16 %v373
        %v737 = vunpack.c.h.b16 %v373
        %v738 = vunpack.c.l.b16 %v374
        %v739 = vunpack.c.h.b16 %v374
        %v740 = vunpack.c.l.b16 %v375
        %v741 = vunpack.c.h.b16 %v375
        %v742 = vunpack.c.l.b16 %v376
        %v743 = vunpack.c.h.b16 %v376
        %v744 = vunpack.c.l.b16 %v377
        %v745 = vunpack.c.h.b16 %v377
        %v746 = vunpack.c.l.b16 %v378
        %v747 = vunpack.c.h.b16 %v378
        %v748 = vunpack.c.l.b16 %v379
        %v749 = vunpack.c.h.b16 %v379
        %v750 = vunpack.c.l.b16 %v380
        %v751 = vunpack.c.h.b16 %v380
        %v752 = vunpack.c.l.b16 %v381
        %v753 = vunpack.c.h.b16 %v381
        %v754 = vunpack.c.l.b16 %v382
        %v755 = vunpack.c.h.b16 %v382
        %v756 = vunpack.c.l.b16 %v383
        %v757 = vunpack.c.h.b16 %v383
        %v758 = vunpack.c.l.b16 %v384
        %v759 = vunpack.c.h.b16 %v384
        %v760 = vunpack.c.l.b16 %v385
        %v761 = vunpack.c.h.b16 %v385
        %v762 = vunpack.c.l.b16 %v386
        %v763 = vunpack.c.h.b16 %v386
        %v764 = vunpack.c.l.b16 %v387
        %v765 = vunpack.c.h.b16 %v387
        %v766 = vunpack.c.l.b16 %v388
        %v767 = vunpack.c.h.b16 %v388
        %v768 = vunpack.c.l.b16 %v389
        %v769 = vunpack.c.h.b16 %v389
        %v770 = vunpack.c.l.b16 %v390
        %v771 = vunpack.c.h.b16 %v390
        %v772 = vunpack.c.l.b16 %v391
        %v773 = vunpack.c.h.b16 %v391
        %v774 = vunpack.c.l.b16 %v392
        %v775 = vunpack.c.h.b16 %v392
        %v776 = vunpack.c.l.b16 %v393
        %v777 = vunpack.c.h.b16 %v393
        %v778 = vunpack.c.l.b16 %v394
        %v779 = vunpack.c.h.b16 %v394
        %v780 = vunpack.c.l.b16 %v395
        %v781 = vunpack.c.h.b16 %v395
        %v782 = vunpack.c.l.b16 %v396
        %v783 = vunpack.c.h.b16 %v396
        %v784 = vunpack.c.l.b16 %v397
        %v785 = vunpack.c.h.b16 %v397
        %v786 = vunpack.c.l.b16 %v398
        %v787 = vunpack.c.h.b16 %v398
        %v788 = vunpack.c.l.b16 %v399
        %v789 = vunpack.c.h.b16 %v399
        %v790 = vunpack.c.l.b16 %v400
        %v791 = vunpack.c.h.b16 %v400
        %v792 = vunpack.c.l.b16 %v401
        %v793 = vunpack.c.h.b16 %v401
        %v794 = vunpack.c.l.b16 %v402
        %v795 = vunpack.c.h.b16 %v402
        %v796 = vunpack.c.l.b16 %v403
        %v797 = vunpack.c.h.b16 %v403
        %v798 = vunpack.c.l.b16 %v404
        %v799 = vunpack.c.h.b16 %v404
        %v800 = vunpack.c.l.b16 %v405
        %v801 = vunpack.c.h.b16 %v405
        %v802 = vunpack.c.l.b16 %v406
        %v803 = vunpack.c.h.b16 %v406
        %v804 = vunpack.c.l.b16 %v407
        %v805 = vunpack.c.h.b16 %v407
        %v806 = vunpack.c.l.b16 %v408
        %v807 = vunpack.c.h.b16 %v408
        %v808 = vunpack.c.l.b16 %v409
        %v809 = vunpack.c.h.b16 %v409
        %v810 = vunpack.c.l.b16 %v410
        %v811 = vunpack.c.h.b16 %v410
        %v812 = vunpack.c.l.b16 %v411
        %v813 = vunpack.c.h.b16 %v411
        %v814 = vunpack.c.l.b16 %v412
        %v815 = vunpack.c.h.b16 %v412
        %v816 = vunpack.c.l.b16 %v413
        %v817 = vunpack.c.h.b16 %v413
        %v818 = vunpack.c.l.b16 %v414
        %v819 = vunpack.c.h.b16 %v414
        %v820 = vunpack.c.l.b16 %v415
        %v821 = vunpack.c.h.b16 %v415
        %v822 = vunpack.c.l.b16 %v416
        %v823 = vunpack.c.h.b16 %v416
        %v824 = vunpack.c.l.b16 %v417
        %v825 = vunpack.c.h.b16 %v417
        %v826 = vunpack.c.l.b16 %v418
        %v827 = vunpack.c.h.b16 %v418
        %v828 = vunpack.c.l.b16 %v419
        %v829 = vunpack.c.h.b16 %v419
        %v830 = vunpack.c.l.b16 %v420
        %v831 = vunpack.c.h.b16 %v420
        %v832 = vunpack.c.l.b16 %v421
        %v833 = vunpack.c.h.b16 %v421
        %v834 = vunpack.c.l.b16 %v422
        %v835 = vunpack.c.h.b16 %v422
        %v836 = vunpack.c.l.b16 %v423
        %v837 = vunpack.c.h.b16 %v423
        %v838 = vunpack.c.l.b16 %v424
        %v839 = vunpack.c.h.b16 %v424
        %v840 = vunpack.c.l.b16 %v425
        %v841 = vunpack.c.h.b16 %v425
        %v842 = vpack.c.b16 %v588, %v586
        %v843 = vpack.c.b16 %v589, %v587
        %v844 = vpack.c.b16 %v592, %v590
        %v845 = vpack.c.b16 %v593, %v591
        %v846 = vpack.c.b16 %v596, %v594
        %v847 = vpack.c.b16 %v597, %v595
        %v848 = vpack.c.b16 %v600, %v598
        %v849 = vpack.c.b16 %v601, %v599
        %v850 = vpack.c.b16 %v604, %v602
        %v851 = vpack.c.b16 %v605, %v603
        %v852 = vpack.c.b16 %v608, %v606
        %v853 = vpack.c.b16 %v609, %v607
        %v854 = vpack.c.b16 %v612, %v610
        %v855 = vpack.c.b16 %v613, %v611
        %v856 = vpack.c.b16 %v616, %v614
        %v857 = vpack.c.b16 %v617, %v615
        %v858 = vpack.c.b16 %v620, %v618
        %v859 = vpack.c.b16 %v621, %v619
        %v860 = vpack.c.b16 %v624, %v622
        %v861 = vpack.c.b16 %v625, %v623
        %v862 = vpack.c.b16 %v628, %v626
        %v863 = vpack.c.b16 %v629, %v627
        %v864 = vpack.c.b16 %v632, %v630
        %v865 = vpack.c.b16 %v633, %v631
        %v866 = vpack.c.b16 %v636, %v634
        %v867 = vpack.c.b16 %v637, %v635
        %v868 = vpack.c.b16 %v640, %v638
        %v869 = vpack.c.b16 %v641, %v639
        %v870 = vpack.c.b16 %v644, %v642
        %v871 = vpack.c.b16 %v645, %v643
        %v872 = vpack.c.b16 %v648, %v646
        %v873 = vpack.c.b16 %v649, %v647
        %v874 = vpack.c.b16 %v652, %v650
        %v875 = vpack.c.b16 %v653, %v651
        %v876 = vpack.c.b16 %v656, %v654
        %v877 = vpack.c.b16 %v657, %v655
        %v878 = vpack.c.b16 %v660, %v658
        %v879 = vpack.c.b16 %v661, %v659
        %v880 = vpack.c.b16 %v664, %v662
        %v881 = vpack.c.b16 %v665, %v663
        %v882 = vpack.c.b16 %v668, %v666
        %v883 = vpack.c.b16 %v669, %v667
        %v884 = vpack.c.b16 %v672, %v670
        %v885 = vpack.c.b16 %v673, %v671
        %v886 = vpack.c.b16 %v676, %v674
        %v887 = vpack.c.b16 %v677, %v675
        %v888 = vpack.c.b16 %v680, %v678
        %v889 = vpack.c.b16 %v681, %v679
        %v890 = vpack.c.b16 %v684, %v682
        %v891 = vpack.c.b16 %v685, %v683
        %v892 = vpack.c.b16 %v688, %v686
        %v893 = vpack.c.b16 %v689, %v687
        %v894 = vpack.c.b16 %v692, %v690
        %v895 = vpack.c.b16 %v693, %v691
        %v896 = vpack.c.b16 %v696, %v694
        %v897 = vpack.c.b16 %v697, %v695
        %v898 = vpack.c.b16 %v700, %v698
        %v899 = vpack.c.b16 %v701, %v699
        %v900 = vpack.c.b16 %v704, %v702
        %v901 = vpack.c.b16 %v705, %v703
        %v902 = vpack.c.b16 %v708, %v706
        %v903 = vpack.c.b16 %v709, %v707
        %v904 = vpack.c.b16 %v712, %v710
        %v905 = vpack.c.b16 %v713, %v711
        %v906 = vpack.c.b16 %v716, %v714
        %v907 = vpack.c.b16 %v717, %v715
        %v908 = vpack.c.b16 %v720, %v718
        %v909 = vpack.c.b16 %v721, %v719
        %v910 = vpack.c.b16 %v724, %v722
        %v911 = vpack.c.b16 %v725, %v723
        %v912 = vpack.c.b16 %v728, %v726
        %v913 = vpack.c.b16 %v729, %v727
        %v914 = vpack.c.b16 %v732, %v730
        %v915 = vpack.c.b16 %v733, %v731
        %v916 = vpack.c.b16 %v736, %v734
        %v917 = vpack.c.b16 %v737, %v735
        %v918 = vpack.c.b16 %v740, %v738
        %v919 = vpack.c.b16 %v741, %v739
        %v920 = vpack.c.b16 %v744, %v742
        %v921 = vpack.c.b16 %v745, %v743
        %v922 = vpack.c.b16 %v748, %v746
        %v923 = vpack.c.b16 %v749, %v747
        %v924 = vpack.c.b16 %v752, %v750
        %v925 = vpack.c.b16 %v753, %v751
        %v926 = vpack.c.b16 %v756, %v754
        %v927 = vpack.c.b16 %v757, %v755
        %v928 = vpack.c.b16 %v760, %v758
        %v929 = vpack.c.b16 %v761, %v759
        %v930 = vpack.c.b16 %v764, %v762
        %v931 = vpack.c.b16 %v765, %v763
        %v932 = vpack.c.b16 %v768, %v766
        %v933 = vpack.c.b16 %v769, %v767
        %v934 = vpack.c.b16 %v772, %v770
        %v935 = vpack.c.b16 %v773, %v771
        %v936 = vpack.c.b16 %v776, %v774
        %v937 = vpack.c.b16 %v777, %v775
        %v938 = vpack.c.b16 %v780, %v778
        %v939 = vpack.c.b16 %v781, %v779
        %v940 = vpack.c.b16 %v784, %v782
        %v941 = vpack.c.b16 %v785, %v783
        %v942 = vpack.c.b16 %v788, %v786
        %v943 = vpack.c.b16 %v789, %v787
        %v944 = vpack.c.b16 %v792, %v790
        %v945 = vpack.c.b16 %v793, %v791
        %v946 = vpack.c.b16 %v796, %v794
        %v947 = vpack.c.b16 %v797, %v795
        %v948 = vpack.c.b16 %v800, %v798
        %v949 = vpack.c.b16 %v801, %v799
        %v950 = vpack.c.b16 %v804, %v802
        %v951 = vpack.c.b16 %v805, %v803
        %v952 = vpack.c.b16 %v808, %v806
        %v953 = vpack.c.b16 %v809, %v807
        %v954 = vpack.c.b16 %v812, %v810
        %v955 = vpack.c.b16 %v813, %v811
        %v956 = vpack.c.b16 %v816, %v814
        %v957 = vpack.c.b16 %v817, %v815
        %v958 = vpack.c.b16 %v820, %v818
        %v959 = vpack.c.b16 %v821, %v819
        %v960 = vpack.c.b16 %v824, %v822
        %v961 = vpack.c.b16 %v825, %v823
        %v962 = vpack.c.b16 %v828, %v826
        %v963 = vpack.c.b16 %v829, %v827
        %v964 = vpack.c.b16 %v832, %v830
        %v965 = vpack.c.b16 %v833, %v831
        %v966 = vpack.c.b16 %v836, %v834
        %v967 = vpack.c.b16 %v837, %v835
        %v968 = vpack.c.b16 %v840, %v838
        %v969 = vpack.c.b16 %v841, %v839
        %v1130 = vunpack.c.l.b16 %v426
        %v1131 = vunpack.c.l.b16 %v427
        %v1132 = vunpack.c.l.b16 %v428
        %v1133 = vunpack.c.l.b16 %v429
        %v1134 = vunpack.c.l.b16 %v430
        %v1135 = vunpack.c.l.b16 %v431
        %v1136 = vunpack.c.l.b16 %v432
        %v1137 = vunpack.c.l.b16 %v433
        %v1138 = vunpack.c.l.b16 %v434
        %v1139 = vunpack.c.l.b16 %v435
        %v1140 = vunpack.c.l.b16 %v436
        %v1141 = vunpack.c.l.b16 %v437
        %v1142 = vunpack.c.l.b16 %v438
        %v1143 = vunpack.c.l.b16 %v439
        %v1144 = vunpack.c.l.b16 %v440
        %v1145 = vunpack.c.l.b16 %v441
        %v1146 = vunpack.c.l.b16 %v442
        %v1147 = vunpack.c.l.b16 %v443
        %v1148 = vunpack.c.l.b16 %v444
        %v1149 = vunpack.c.l.b16 %v445
        %v1150 = vunpack.c.l.b16 %v446
        %v1151 = vunpack.c.l.b16 %v447
        %v1152 = vunpack.c.l.b16 %v448
        %v1153 = vunpack.c.l.b16 %v449
        %v1154 = vunpack.c.l.b16 %v450
        %v1155 = vunpack.c.l.b16 %v451
        %v1156 = vunpack.c.l.b16 %v452
        %v1157 = vunpack.c.l.b16 %v453
        %v1158 = vunpack.c.l.b16 %v454
        %v1159 = vunpack.c.l.b16 %v455
        %v1160 = vunpack.c.l.b16 %v456
        %v1161 = vunpack.c.l.b16 %v457
        %v1162 = vpack.c.b16 %v1131, %v1130
        %v1163 = vpack.c.b16 %v1133, %v1132
        %v1164 = vpack.c.b16 %v1135, %v1134
        %v1165 = vpack.c.b16 %v1137, %v1136
        %v1166 = vpack.c.b16 %v1139, %v1138
        %v1167 = vpack.c.b16 %v1141, %v1140
        %v1168 = vpack.c.b16 %v1143, %v1142
        %v1169 = vpack.c.b16 %v1145, %v1144
        %v1170 = vpack.c.b16 %v1147, %v1146
        %v1171 = vpack.c.b16 %v1149, %v1148
        %v1172 = vpack.c.b16 %v1151, %v1150
        %v1173 = vpack.c.b16 %v1153, %v1152
        %v1174 = vpack.c.b16 %v1155, %v1154
        %v1175 = vpack.c.b16 %v1157, %v1156
        %v1176 = vpack.c.b16 %v1159, %v1158
        %v1177 = vpack.c.b16 %v1161, %v1160
        %1194 = vmatprep.subr.bf16.mxu0 0
        %1195 = vmatpush1.bf16.msra.mxu0 %v1162
        %1196 = vmatprep.subr.bf16.mxu0 0
        %1197 = vmatpush1.bf16.msra.mxu0 %v1163
        %1198 = vmatprep.subr.bf16.mxu0 0
        %1199 = vmatpush1.bf16.msra.mxu0 %v1164
        %1200 = vmatprep.subr.bf16.mxu0 0
        %1201 = vmatpush1.bf16.msra.mxu0 %v1165
        %1202 = vmatprep.subr.bf16.mxu0 0
        %1203 = vmatpush1.bf16.msra.mxu0 %v1166
        %1204 = vmatprep.subr.bf16.mxu0 0
        %1205 = vmatpush1.bf16.msra.mxu0 %v1167
        %1206 = vmatprep.subr.bf16.mxu0 0
        %1207 = vmatpush1.bf16.msra.mxu0 %v1168
        %1208 = vmatprep.subr.bf16.mxu0 0
        %1209 = vmatpush1.bf16.msra.mxu0 %v1169
        %1210 = vmatprep.subr.bf16.mxu0 0
        %1211 = vmatpush1.bf16.msra.mxu0 %v1170
        %1212 = vmatprep.subr.bf16.mxu0 0
        %1213 = vmatpush1.bf16.msra.mxu0 %v1171
        %1214 = vmatprep.subr.bf16.mxu0 0
        %1215 = vmatpush1.bf16.msra.mxu0 %v1172
        %1216 = vmatprep.subr.bf16.mxu0 0
        %1217 = vmatpush1.bf16.msra.mxu0 %v1173
        %1218 = vmatprep.subr.bf16.mxu0 0
        %1219 = vmatpush1.bf16.msra.mxu0 %v1174
        %1220 = vmatprep.subr.bf16.mxu0 0
        %1221 = vmatpush1.bf16.msra.mxu0 %v1175
        %1222 = vmatprep.subr.bf16.mxu0 0
        %1223 = vmatpush1.bf16.msra.mxu0 %v1176
        %1224 = vmatprep.subr.bf16.mxu0 0
        %1225 = vmatpush1.bf16.msra.mxu0 %v1177
        %1226 = vmatprep.mubr.bf16.mxu0 %v843
        %1227 = vmatmul.mubr.bf16.gmra.mrb[0].mxu0 %v842
        %v1228 = vpop.f32.mrb[0].mxu0
        %v1229 = vadd.f32 0.0, %v1228
        %v1230 = vpop.f32.mrb[0].mxu0
        %v1231 = vpop.f32.mrb[0].mxu0
        %v1232 = vadd.f32 0.0, %v1231
        %v1233 = vpop.f32.mrb[0].mxu0
        %1234 = vmatprep.mubr.bf16.mxu0 %v845
        %1235 = vmatmul.mubr.bf16.gmra.mrb[0].mxu0 %v844
        %v1236 = vpop.f32.mrb[0].mxu0
        %v1237 = vadd.f32 0.0, %v1236
        %v1238 = vpop.f32.mrb[0].mxu0
        %v1239 = vpop.f32.mrb[0].mxu0
        %v1240 = vadd.f32 0.0, %v1239
        %v1241 = vpop.f32.mrb[0].mxu0
        %1242 = vmatprep.mubr.bf16.mxu0 %v847
        %1243 = vmatmul.mubr.bf16.gmra.mrb[0].mxu0 %v846
        %v1244 = vpop.f32.mrb[0].mxu0
        %v1245 = vadd.f32 0.0, %v1244
        %v1246 = vpop.f32.mrb[0].mxu0
        %v1247 = vpop.f32.mrb[0].mxu0
        %v1248 = vadd.f32 0.0, %v1247
        %v1249 = vpop.f32.mrb[0].mxu0
        %1250 = vmatprep.mubr.bf16.mxu0 %v849
        %1251 = vmatmul.mubr.bf16.gmra.mrb[0].mxu0 %v848
        %v1252 = vpop.f32.mrb[0].mxu0
        %v1253 = vadd.f32 0.0, %v1252
        %v1254 = vpop.f32.mrb[0].mxu0
        %v1255 = vpop.f32.mrb[0].mxu0
        %v1256 = vadd.f32 0.0, %v1255
        %v1257 = vpop.f32.mrb[0].mxu0
        %1258 = vmatprep.mubr.bf16.mxu0 %v851
        %1259 = vmatmul.mubr.bf16.gmra.mrb[0].mxu0 %v850
        %v1260 = vpop.f32.mrb[0].mxu0
        %v1261 = vadd.f32 0.0, %v1260
        %v1262 = vpop.f32.mrb[0].mxu0
        %v1263 = vpop.f32.mrb[0].mxu0
        %v1264 = vadd.f32 0.0, %v1263
        %v1265 = vpop.f32.mrb[0].mxu0
        %1266 = vmatprep.mubr.bf16.mxu0 %v853
        %1267 = vmatmul.mubr.bf16.gmra.mrb[0].mxu0 %v852
        %v1268 = vpop.f32.mrb[0].mxu0
        %v1269 = vadd.f32 0.0, %v1268
        %v1270 = vpop.f32.mrb[0].mxu0
        %v1271 = vpop.f32.mrb[0].mxu0
        %v1272 = vadd.f32 0.0, %v1271
        %v1273 = vpop.f32.mrb[0].mxu0
        %1274 = vmatprep.mubr.bf16.mxu0 %v855
        %1275 = vmatmul.mubr.bf16.gmra.mrb[0].mxu0 %v854
        %v1276 = vpop.f32.mrb[0].mxu0
        %v1277 = vadd.f32 0.0, %v1276
        %v1278 = vpop.f32.mrb[0].mxu0
        %v1279 = vpop.f32.mrb[0].mxu0
        %v1280 = vadd.f32 0.0, %v1279
        %v1281 = vpop.f32.mrb[0].mxu0
        %1282 = vmatprep.mubr.bf16.mxu0 %v857
        %1283 = vmatmul.mubr.bf16.gmra.mrb[0].mxu0 %v856
        %v1284 = vpop.f32.mrb[0].mxu0
        %v1285 = vadd.f32 0.0, %v1284
        %v1286 = vpop.f32.mrb[0].mxu0
        %v1287 = vpop.f32.mrb[0].mxu0
        %v1288 = vadd.f32 0.0, %v1287
        %v1289 = vpop.f32.mrb[0].mxu0
        %1290 = vmatprep.mubr.bf16.mxu0 %v859
        %1291 = vmatmul.mubr.bf16.gmra.mrb[0].mxu0 %v858
        %v1292 = vpop.f32.mrb[0].mxu0
        %v1293 = vadd.f32 0.0, %v1292
        %v1294 = vpop.f32.mrb[0].mxu0
        %v1295 = vpop.f32.mrb[0].mxu0
        %v1296 = vadd.f32 0.0, %v1295
        %v1297 = vpop.f32.mrb[0].mxu0
        %1298 = vmatprep.mubr.bf16.mxu0 %v861
        %1299 = vmatmul.mubr.bf16.gmra.mrb[0].mxu0 %v860
        %v1300 = vpop.f32.mrb[0].mxu0
        %v1301 = vadd.f32 0.0, %v1300
        %v1302 = vpop.f32.mrb[0].mxu0
        %v1303 = vpop.f32.mrb[0].mxu0
        %v1304 = vadd.f32 0.0, %v1303
        %v1305 = vpop.f32.mrb[0].mxu0
        %1306 = vmatprep.mubr.bf16.mxu0 %v863
        %1307 = vmatmul.mubr.bf16.gmra.mrb[0].mxu0 %v862
        %v1308 = vpop.f32.mrb[0].mxu0
        %v1309 = vadd.f32 0.0, %v1308
        %v1310 = vpop.f32.mrb[0].mxu0
        %v1311 = vpop.f32.mrb[0].mxu0
        %v1312 = vadd.f32 0.0, %v1311
        %v1313 = vpop.f32.mrb[0].mxu0
        %1314 = vmatprep.mubr.bf16.mxu0 %v865
        %1315 = vmatmul.mubr.bf16.gmra.mrb[0].mxu0 %v864
        %v1316 = vpop.f32.mrb[0].mxu0
        %v1317 = vadd.f32 0.0, %v1316
        %v1318 = vpop.f32.mrb[0].mxu0
        %v1319 = vpop.f32.mrb[0].mxu0
        %v1320 = vadd.f32 0.0, %v1319
        %v1321 = vpop.f32.mrb[0].mxu0
        %1322 = vmatprep.mubr.bf16.mxu0 %v867
        %1323 = vmatmul.mubr.bf16.gmra.mrb[0].mxu0 %v866
        %v1324 = vpop.f32.mrb[0].mxu0
        %v1325 = vadd.f32 0.0, %v1324
        %v1326 = vpop.f32.mrb[0].mxu0
        %v1327 = vpop.f32.mrb[0].mxu0
        %v1328 = vadd.f32 0.0, %v1327
        %v1329 = vpop.f32.mrb[0].mxu0
        %1330 = vmatprep.mubr.bf16.mxu0 %v869
        %1331 = vmatmul.mubr.bf16.gmra.mrb[0].mxu0 %v868
        %v1332 = vpop.f32.mrb[0].mxu0
        %v1333 = vadd.f32 0.0, %v1332
        %v1334 = vpop.f32.mrb[0].mxu0
        %v1335 = vpop.f32.mrb[0].mxu0
        %v1336 = vadd.f32 0.0, %v1335
        %v1337 = vpop.f32.mrb[0].mxu0
        %1338 = vmatprep.mubr.bf16.mxu0 %v871
        %1339 = vmatmul.mubr.bf16.gmra.mrb[0].mxu0 %v870
        %v1340 = vpop.f32.mrb[0].mxu0
        %v1341 = vadd.f32 0.0, %v1340
        %v1342 = vpop.f32.mrb[0].mxu0
        %v1343 = vpop.f32.mrb[0].mxu0
        %v1344 = vadd.f32 0.0, %v1343
        %v1345 = vpop.f32.mrb[0].mxu0
        %1346 = vmatprep.mubr.bf16.mxu0 %v873
        %1347 = vmatmul.mubr.bf16.gmra.mrb[0].mxu0 %v872
        %v1348 = vpop.f32.mrb[0].mxu0
        %v1349 = vadd.f32 0.0, %v1348
        %v1350 = vpop.f32.mrb[0].mxu0
        %v1351 = vpop.f32.mrb[0].mxu0
        %v1352 = vadd.f32 0.0, %v1351
        %v1353 = vpop.f32.mrb[0].mxu0
        %1354 = vmatprep.mubr.bf16.mxu0 %v875
        %1355 = vmatmul.mubr.bf16.gmra.mrb[0].mxu0 %v874
        %v1356 = vpop.f32.mrb[0].mxu0
        %v1357 = vadd.f32 0.0, %v1356
        %v1358 = vpop.f32.mrb[0].mxu0
        %v1359 = vpop.f32.mrb[0].mxu0
        %v1360 = vadd.f32 0.0, %v1359
        %v1361 = vpop.f32.mrb[0].mxu0
        %1362 = vmatprep.mubr.bf16.mxu0 %v877
        %1363 = vmatmul.mubr.bf16.gmra.mrb[0].mxu0 %v876
        %v1364 = vpop.f32.mrb[0].mxu0
        %v1365 = vadd.f32 0.0, %v1364
        %v1366 = vpop.f32.mrb[0].mxu0
        %v1367 = vpop.f32.mrb[0].mxu0
        %v1368 = vadd.f32 0.0, %v1367
        %v1369 = vpop.f32.mrb[0].mxu0
        %1370 = vmatprep.mubr.bf16.mxu0 %v879
        %1371 = vmatmul.mubr.bf16.gmra.mrb[0].mxu0 %v878
        %v1372 = vpop.f32.mrb[0].mxu0
        %v1373 = vadd.f32 0.0, %v1372
        %v1374 = vpop.f32.mrb[0].mxu0
        %v1375 = vpop.f32.mrb[0].mxu0
        %v1376 = vadd.f32 0.0, %v1375
        %v1377 = vpop.f32.mrb[0].mxu0
        %1378 = vmatprep.mubr.bf16.mxu0 %v881
        %1379 = vmatmul.mubr.bf16.gmra.mrb[0].mxu0 %v880
        %v1380 = vpop.f32.mrb[0].mxu0
        %v1381 = vadd.f32 0.0, %v1380
        %v1382 = vpop.f32.mrb[0].mxu0
        %v1383 = vpop.f32.mrb[0].mxu0
        %v1384 = vadd.f32 0.0, %v1383
        %v1385 = vpop.f32.mrb[0].mxu0
        %1386 = vmatprep.mubr.bf16.mxu0 %v883
        %1387 = vmatmul.mubr.bf16.gmra.mrb[0].mxu0 %v882
        %v1388 = vpop.f32.mrb[0].mxu0
        %v1389 = vadd.f32 0.0, %v1388
        %v1390 = vpop.f32.mrb[0].mxu0
        %v1391 = vpop.f32.mrb[0].mxu0
        %v1392 = vadd.f32 0.0, %v1391
        %v1393 = vpop.f32.mrb[0].mxu0
        %1394 = vmatprep.mubr.bf16.mxu0 %v885
        %1395 = vmatmul.mubr.bf16.gmra.mrb[0].mxu0 %v884
        %v1396 = vpop.f32.mrb[0].mxu0
        %v1397 = vadd.f32 0.0, %v1396
        %v1398 = vpop.f32.mrb[0].mxu0
        %v1399 = vpop.f32.mrb[0].mxu0
        %v1400 = vadd.f32 0.0, %v1399
        %v1401 = vpop.f32.mrb[0].mxu0
        %1402 = vmatprep.mubr.bf16.mxu0 %v887
        %1403 = vmatmul.mubr.bf16.gmra.mrb[0].mxu0 %v886
        %v1404 = vpop.f32.mrb[0].mxu0
        %v1405 = vadd.f32 0.0, %v1404
        %v1406 = vpop.f32.mrb[0].mxu0
        %v1407 = vpop.f32.mrb[0].mxu0
        %v1408 = vadd.f32 0.0, %v1407
        %v1409 = vpop.f32.mrb[0].mxu0
        %1410 = vmatprep.mubr.bf16.mxu0 %v889
        %1411 = vmatmul.mubr.bf16.gmra.mrb[0].mxu0 %v888
        %v1412 = vpop.f32.mrb[0].mxu0
        %v1413 = vadd.f32 0.0, %v1412
        %v1414 = vpop.f32.mrb[0].mxu0
        %v1415 = vpop.f32.mrb[0].mxu0
        %v1416 = vadd.f32 0.0, %v1415
        %v1417 = vpop.f32.mrb[0].mxu0
        %1418 = vmatprep.mubr.bf16.mxu0 %v891
        %1419 = vmatmul.mubr.bf16.gmra.mrb[0].mxu0 %v890
        %v1420 = vpop.f32.mrb[0].mxu0
        %v1421 = vadd.f32 0.0, %v1420
        %v1422 = vpop.f32.mrb[0].mxu0
        %v1423 = vpop.f32.mrb[0].mxu0
        %v1424 = vadd.f32 0.0, %v1423
        %v1425 = vpop.f32.mrb[0].mxu0
        %1426 = vmatprep.mubr.bf16.mxu0 %v893
        %1427 = vmatmul.mubr.bf16.gmra.mrb[0].mxu0 %v892
        %v1428 = vpop.f32.mrb[0].mxu0
        %v1429 = vadd.f32 0.0, %v1428
        %v1430 = vpop.f32.mrb[0].mxu0
        %v1431 = vpop.f32.mrb[0].mxu0
        %v1432 = vadd.f32 0.0, %v1431
        %v1433 = vpop.f32.mrb[0].mxu0
        %1434 = vmatprep.mubr.bf16.mxu0 %v895
        %1435 = vmatmul.mubr.bf16.gmra.mrb[0].mxu0 %v894
        %v1436 = vpop.f32.mrb[0].mxu0
        %v1437 = vadd.f32 0.0, %v1436
        %v1438 = vpop.f32.mrb[0].mxu0
        %v1439 = vpop.f32.mrb[0].mxu0
        %v1440 = vadd.f32 0.0, %v1439
        %v1441 = vpop.f32.mrb[0].mxu0
        %1442 = vmatprep.mubr.bf16.mxu0 %v897
        %1443 = vmatmul.mubr.bf16.gmra.mrb[0].mxu0 %v896
        %v1444 = vpop.f32.mrb[0].mxu0
        %v1445 = vadd.f32 0.0, %v1444
        %v1446 = vpop.f32.mrb[0].mxu0
        %v1447 = vpop.f32.mrb[0].mxu0
        %v1448 = vadd.f32 0.0, %v1447
        %v1449 = vpop.f32.mrb[0].mxu0
        %1450 = vmatprep.mubr.bf16.mxu0 %v899
        %1451 = vmatmul.mubr.bf16.gmra.mrb[0].mxu0 %v898
        %v1452 = vpop.f32.mrb[0].mxu0
        %v1453 = vadd.f32 0.0, %v1452
        %v1454 = vpop.f32.mrb[0].mxu0
        %v1455 = vpop.f32.mrb[0].mxu0
        %v1456 = vadd.f32 0.0, %v1455
        %v1457 = vpop.f32.mrb[0].mxu0
        %1458 = vmatprep.mubr.bf16.mxu0 %v901
        %1459 = vmatmul.mubr.bf16.gmra.mrb[0].mxu0 %v900
        %v1460 = vpop.f32.mrb[0].mxu0
        %v1461 = vadd.f32 0.0, %v1460
        %v1462 = vpop.f32.mrb[0].mxu0
        %v1463 = vpop.f32.mrb[0].mxu0
        %v1464 = vadd.f32 0.0, %v1463
        %v1465 = vpop.f32.mrb[0].mxu0
        %1466 = vmatprep.mubr.bf16.mxu0 %v903
        %1467 = vmatmul.mubr.bf16.gmra.mrb[0].mxu0 %v902
        %v1468 = vpop.f32.mrb[0].mxu0
        %v1469 = vadd.f32 0.0, %v1468
        %v1470 = vpop.f32.mrb[0].mxu0
        %v1471 = vpop.f32.mrb[0].mxu0
        %v1472 = vadd.f32 0.0, %v1471
        %v1473 = vpop.f32.mrb[0].mxu0
        %1474 = vmatprep.mubr.bf16.mxu0 %v905
        %1475 = vmatmul.mubr.bf16.gmra.mrb[0].mxu0 %v904
        %v1476 = vpop.f32.mrb[0].mxu0
        %v1477 = vadd.f32 0.0, %v1476
        %v1478 = vpop.f32.mrb[0].mxu0
        %v1479 = vpop.f32.mrb[0].mxu0
        %v1480 = vadd.f32 0.0, %v1479
        %v1481 = vpop.f32.mrb[0].mxu0
        %1482 = vmatprep.mubr.bf16.mxu0 %v907
        %1483 = vmatmul.mubr.bf16.gmra.mrb[0].mxu0 %v906
        %v1484 = vpop.f32.mrb[0].mxu0
        %v1485 = vadd.f32 0.0, %v1484
        %v1486 = vpop.f32.mrb[0].mxu0
        %v1487 = vpop.f32.mrb[0].mxu0
        %v1488 = vadd.f32 0.0, %v1487
        %v1489 = vpop.f32.mrb[0].mxu0
        %1490 = vmatprep.mubr.bf16.mxu0 %v909
        %1491 = vmatmul.mubr.bf16.gmra.mrb[0].mxu0 %v908
        %v1492 = vpop.f32.mrb[0].mxu0
        %v1493 = vadd.f32 0.0, %v1492
        %v1494 = vpop.f32.mrb[0].mxu0
        %v1495 = vpop.f32.mrb[0].mxu0
        %v1496 = vadd.f32 0.0, %v1495
        %v1497 = vpop.f32.mrb[0].mxu0
        %1498 = vmatprep.mubr.bf16.mxu0 %v911
        %1499 = vmatmul.mubr.bf16.gmra.mrb[0].mxu0 %v910
        %v1500 = vpop.f32.mrb[0].mxu0
        %v1501 = vadd.f32 0.0, %v1500
        %v1502 = vpop.f32.mrb[0].mxu0
        %v1503 = vpop.f32.mrb[0].mxu0
        %v1504 = vadd.f32 0.0, %v1503
        %v1505 = vpop.f32.mrb[0].mxu0
        %1506 = vmatprep.mubr.bf16.mxu0 %v913
        %1507 = vmatmul.mubr.bf16.gmra.mrb[0].mxu0 %v912
        %v1508 = vpop.f32.mrb[0].mxu0
        %v1509 = vadd.f32 0.0, %v1508
        %v1510 = vpop.f32.mrb[0].mxu0
        %v1511 = vpop.f32.mrb[0].mxu0
        %v1512 = vadd.f32 0.0, %v1511
        %v1513 = vpop.f32.mrb[0].mxu0
        %1514 = vmatprep.mubr.bf16.mxu0 %v915
        %1515 = vmatmul.mubr.bf16.gmra.mrb[0].mxu0 %v914
        %v1516 = vpop.f32.mrb[0].mxu0
        %v1517 = vadd.f32 0.0, %v1516
        %v1518 = vpop.f32.mrb[0].mxu0
        %v1519 = vpop.f32.mrb[0].mxu0
        %v1520 = vadd.f32 0.0, %v1519
        %v1521 = vpop.f32.mrb[0].mxu0
        %1522 = vmatprep.mubr.bf16.mxu0 %v917
        %1523 = vmatmul.mubr.bf16.gmra.mrb[0].mxu0 %v916
        %v1524 = vpop.f32.mrb[0].mxu0
        %v1525 = vadd.f32 0.0, %v1524
        %v1526 = vpop.f32.mrb[0].mxu0
        %v1527 = vpop.f32.mrb[0].mxu0
        %v1528 = vadd.f32 0.0, %v1527
        %v1529 = vpop.f32.mrb[0].mxu0
        %1530 = vmatprep.mubr.bf16.mxu0 %v919
        %1531 = vmatmul.mubr.bf16.gmra.mrb[0].mxu0 %v918
        %v1532 = vpop.f32.mrb[0].mxu0
        %v1533 = vadd.f32 0.0, %v1532
        %v1534 = vpop.f32.mrb[0].mxu0
        %v1535 = vpop.f32.mrb[0].mxu0
        %v1536 = vadd.f32 0.0, %v1535
        %v1537 = vpop.f32.mrb[0].mxu0
        %1538 = vmatprep.mubr.bf16.mxu0 %v921
        %1539 = vmatmul.mubr.bf16.gmra.mrb[0].mxu0 %v920
        %v1540 = vpop.f32.mrb[0].mxu0
        %v1541 = vadd.f32 0.0, %v1540
        %v1542 = vpop.f32.mrb[0].mxu0
        %v1543 = vpop.f32.mrb[0].mxu0
        %v1544 = vadd.f32 0.0, %v1543
        %v1545 = vpop.f32.mrb[0].mxu0
        %1546 = vmatprep.mubr.bf16.mxu0 %v923
        %1547 = vmatmul.mubr.bf16.gmra.mrb[0].mxu0 %v922
        %v1548 = vpop.f32.mrb[0].mxu0
        %v1549 = vadd.f32 0.0, %v1548
        %v1550 = vpop.f32.mrb[0].mxu0
        %v1551 = vpop.f32.mrb[0].mxu0
        %v1552 = vadd.f32 0.0, %v1551
        %v1553 = vpop.f32.mrb[0].mxu0
        %1554 = vmatprep.mubr.bf16.mxu0 %v925
        %1555 = vmatmul.mubr.bf16.gmra.mrb[0].mxu0 %v924
        %v1556 = vpop.f32.mrb[0].mxu0
        %v1557 = vadd.f32 0.0, %v1556
        %v1558 = vpop.f32.mrb[0].mxu0
        %v1559 = vpop.f32.mrb[0].mxu0
        %v1560 = vadd.f32 0.0, %v1559
        %v1561 = vpop.f32.mrb[0].mxu0
        %1562 = vmatprep.mubr.bf16.mxu0 %v927
        %1563 = vmatmul.mubr.bf16.gmra.mrb[0].mxu0 %v926
        %v1564 = vpop.f32.mrb[0].mxu0
        %v1565 = vadd.f32 0.0, %v1564
        %v1566 = vpop.f32.mrb[0].mxu0
        %v1567 = vpop.f32.mrb[0].mxu0
        %v1568 = vadd.f32 0.0, %v1567
        %v1569 = vpop.f32.mrb[0].mxu0
        %1570 = vmatprep.mubr.bf16.mxu0 %v929
        %1571 = vmatmul.mubr.bf16.gmra.mrb[0].mxu0 %v928
        %v1572 = vpop.f32.mrb[0].mxu0
        %v1573 = vadd.f32 0.0, %v1572
        %v1574 = vpop.f32.mrb[0].mxu0
        %v1575 = vpop.f32.mrb[0].mxu0
        %v1576 = vadd.f32 0.0, %v1575
        %v1577 = vpop.f32.mrb[0].mxu0
        %1578 = vmatprep.mubr.bf16.mxu0 %v931
        %1579 = vmatmul.mubr.bf16.gmra.mrb[0].mxu0 %v930
        %v1580 = vpop.f32.mrb[0].mxu0
        %v1581 = vadd.f32 0.0, %v1580
        %v1582 = vpop.f32.mrb[0].mxu0
        %v1583 = vpop.f32.mrb[0].mxu0
        %v1584 = vadd.f32 0.0, %v1583
        %v1585 = vpop.f32.mrb[0].mxu0
        %1586 = vmatprep.mubr.bf16.mxu0 %v933
        %1587 = vmatmul.mubr.bf16.gmra.mrb[0].mxu0 %v932
        %v1588 = vpop.f32.mrb[0].mxu0
        %v1589 = vadd.f32 0.0, %v1588
        %v1590 = vpop.f32.mrb[0].mxu0
        %v1591 = vpop.f32.mrb[0].mxu0
        %v1592 = vadd.f32 0.0, %v1591
        %v1593 = vpop.f32.mrb[0].mxu0
        %1594 = vmatprep.mubr.bf16.mxu0 %v935
        %1595 = vmatmul.mubr.bf16.gmra.mrb[0].mxu0 %v934
        %v1596 = vpop.f32.mrb[0].mxu0
        %v1597 = vadd.f32 0.0, %v1596
        %v1598 = vpop.f32.mrb[0].mxu0
        %v1599 = vpop.f32.mrb[0].mxu0
        %v1600 = vadd.f32 0.0, %v1599
        %v1601 = vpop.f32.mrb[0].mxu0
        %1602 = vmatprep.mubr.bf16.mxu0 %v937
        %1603 = vmatmul.mubr.bf16.gmra.mrb[0].mxu0 %v936
        %v1604 = vpop.f32.mrb[0].mxu0
        %v1605 = vadd.f32 0.0, %v1604
        %v1606 = vpop.f32.mrb[0].mxu0
        %v1607 = vpop.f32.mrb[0].mxu0
        %v1608 = vadd.f32 0.0, %v1607
        %v1609 = vpop.f32.mrb[0].mxu0
        %1610 = vmatprep.mubr.bf16.mxu0 %v939
        %1611 = vmatmul.mubr.bf16.gmra.mrb[0].mxu0 %v938
        %v1612 = vpop.f32.mrb[0].mxu0
        %v1613 = vadd.f32 0.0, %v1612
        %v1614 = vpop.f32.mrb[0].mxu0
        %v1615 = vpop.f32.mrb[0].mxu0
        %v1616 = vadd.f32 0.0, %v1615
        %v1617 = vpop.f32.mrb[0].mxu0
        %1618 = vmatprep.mubr.bf16.mxu0 %v941
        %1619 = vmatmul.mubr.bf16.gmra.mrb[0].mxu0 %v940
        %v1620 = vpop.f32.mrb[0].mxu0
        %v1621 = vadd.f32 0.0, %v1620
        %v1622 = vpop.f32.mrb[0].mxu0
        %v1623 = vpop.f32.mrb[0].mxu0
        %v1624 = vadd.f32 0.0, %v1623
        %v1625 = vpop.f32.mrb[0].mxu0
        %1626 = vmatprep.mubr.bf16.mxu0 %v943
        %1627 = vmatmul.mubr.bf16.gmra.mrb[0].mxu0 %v942
        %v1628 = vpop.f32.mrb[0].mxu0
        %v1629 = vadd.f32 0.0, %v1628
        %v1630 = vpop.f32.mrb[0].mxu0
        %v1631 = vpop.f32.mrb[0].mxu0
        %v1632 = vadd.f32 0.0, %v1631
        %v1633 = vpop.f32.mrb[0].mxu0
        %1634 = vmatprep.mubr.bf16.mxu0 %v945
        %1635 = vmatmul.mubr.bf16.gmra.mrb[0].mxu0 %v944
        %v1636 = vpop.f32.mrb[0].mxu0
        %v1637 = vadd.f32 0.0, %v1636
        %v1638 = vpop.f32.mrb[0].mxu0
        %v1639 = vpop.f32.mrb[0].mxu0
        %v1640 = vadd.f32 0.0, %v1639
        %v1641 = vpop.f32.mrb[0].mxu0
        %1642 = vmatprep.mubr.bf16.mxu0 %v947
        %1643 = vmatmul.mubr.bf16.gmra.mrb[0].mxu0 %v946
        %v1644 = vpop.f32.mrb[0].mxu0
        %v1645 = vadd.f32 0.0, %v1644
        %v1646 = vpop.f32.mrb[0].mxu0
        %v1647 = vpop.f32.mrb[0].mxu0
        %v1648 = vadd.f32 0.0, %v1647
        %v1649 = vpop.f32.mrb[0].mxu0
        %1650 = vmatprep.mubr.bf16.mxu0 %v949
        %1651 = vmatmul.mubr.bf16.gmra.mrb[0].mxu0 %v948
        %v1652 = vpop.f32.mrb[0].mxu0
        %v1653 = vadd.f32 0.0, %v1652
        %v1654 = vpop.f32.mrb[0].mxu0
        %v1655 = vpop.f32.mrb[0].mxu0
        %v1656 = vadd.f32 0.0, %v1655
        %v1657 = vpop.f32.mrb[0].mxu0
        %1658 = vmatprep.mubr.bf16.mxu0 %v951
        %1659 = vmatmul.mubr.bf16.gmra.mrb[0].mxu0 %v950
        %v1660 = vpop.f32.mrb[0].mxu0
        %v1661 = vadd.f32 0.0, %v1660
        %v1662 = vpop.f32.mrb[0].mxu0
        %v1663 = vpop.f32.mrb[0].mxu0
        %v1664 = vadd.f32 0.0, %v1663
        %v1665 = vpop.f32.mrb[0].mxu0
        %1666 = vmatprep.mubr.bf16.mxu0 %v953
        %1667 = vmatmul.mubr.bf16.gmra.mrb[0].mxu0 %v952
        %v1668 = vpop.f32.mrb[0].mxu0
        %v1669 = vadd.f32 0.0, %v1668
        %v1670 = vpop.f32.mrb[0].mxu0
        %v1671 = vpop.f32.mrb[0].mxu0
        %v1672 = vadd.f32 0.0, %v1671
        %v1673 = vpop.f32.mrb[0].mxu0
        %1674 = vmatprep.mubr.bf16.mxu0 %v955
        %1675 = vmatmul.mubr.bf16.gmra.mrb[0].mxu0 %v954
        %v1676 = vpop.f32.mrb[0].mxu0
        %v1677 = vadd.f32 0.0, %v1676
        %v1678 = vpop.f32.mrb[0].mxu0
        %v1679 = vpop.f32.mrb[0].mxu0
        %v1680 = vadd.f32 0.0, %v1679
        %v1681 = vpop.f32.mrb[0].mxu0
        %1682 = vmatprep.mubr.bf16.mxu0 %v957
        %1683 = vmatmul.mubr.bf16.gmra.mrb[0].mxu0 %v956
        %v1684 = vpop.f32.mrb[0].mxu0
        %v1685 = vadd.f32 0.0, %v1684
        %v1686 = vpop.f32.mrb[0].mxu0
        %v1687 = vpop.f32.mrb[0].mxu0
        %v1688 = vadd.f32 0.0, %v1687
        %v1689 = vpop.f32.mrb[0].mxu0
        %1690 = vmatprep.mubr.bf16.mxu0 %v959
        %1691 = vmatmul.mubr.bf16.gmra.mrb[0].mxu0 %v958
        %v1692 = vpop.f32.mrb[0].mxu0
        %v1693 = vadd.f32 0.0, %v1692
        %v1694 = vpop.f32.mrb[0].mxu0
        %v1695 = vpop.f32.mrb[0].mxu0
        %v1696 = vadd.f32 0.0, %v1695
        %v1697 = vpop.f32.mrb[0].mxu0
        %1698 = vmatprep.mubr.bf16.mxu0 %v961
        %1699 = vmatmul.mubr.bf16.gmra.mrb[0].mxu0 %v960
        %v1700 = vpop.f32.mrb[0].mxu0
        %v1701 = vadd.f32 0.0, %v1700
        %v1702 = vpop.f32.mrb[0].mxu0
        %v1703 = vpop.f32.mrb[0].mxu0
        %v1704 = vadd.f32 0.0, %v1703
        %v1705 = vpop.f32.mrb[0].mxu0
        %1706 = vmatprep.mubr.bf16.mxu0 %v963
        %1707 = vmatmul.mubr.bf16.gmra.mrb[0].mxu0 %v962
        %v1708 = vpop.f32.mrb[0].mxu0
        %v1709 = vadd.f32 0.0, %v1708
        %v1710 = vpop.f32.mrb[0].mxu0
        %v1711 = vpop.f32.mrb[0].mxu0
        %v1712 = vadd.f32 0.0, %v1711
        %v1713 = vpop.f32.mrb[0].mxu0
        %1714 = vmatprep.mubr.bf16.mxu0 %v965
        %1715 = vmatmul.mubr.bf16.gmra.mrb[0].mxu0 %v964
        %v1716 = vpop.f32.mrb[0].mxu0
        %v1717 = vadd.f32 0.0, %v1716
        %v1718 = vpop.f32.mrb[0].mxu0
        %v1719 = vpop.f32.mrb[0].mxu0
        %v1720 = vadd.f32 0.0, %v1719
        %v1721 = vpop.f32.mrb[0].mxu0
        %1722 = vmatprep.mubr.bf16.mxu0 %v967
        %1723 = vmatmul.mubr.bf16.gmra.mrb[0].mxu0 %v966
        %v1724 = vpop.f32.mrb[0].mxu0
        %v1725 = vadd.f32 0.0, %v1724
        %v1726 = vpop.f32.mrb[0].mxu0
        %v1727 = vpop.f32.mrb[0].mxu0
        %v1728 = vadd.f32 0.0, %v1727
        %v1729 = vpop.f32.mrb[0].mxu0
        %1730 = vmatprep.mubr.bf16.mxu0 %v969
        %1731 = vmatmul.mubr.bf16.gmra.mrb[0].mxu0 %v968
        %v1732 = vpop.f32.mrb[0].mxu0
        %v1733 = vadd.f32 0.0, %v1732
        %v1734 = vpop.f32.mrb[0].mxu0
        %v1735 = vpop.f32.mrb[0].mxu0
        %v1736 = vadd.f32 0.0, %v1735
        %v1737 = vpop.f32.mrb[0].mxu0
        %1738 = vdwg.mxu0
        %v1739 = vld [vmem:[#allocation4] sm:$0x1]
        %v1741 = vlaneseq
        %v1742 = vshrl.u32 %v1741, 7
        %v1743 = vsub.s32 0, %v1742
        %v1744 = vrot.slane %v1739, %v1743
        %v1746 = vmul.f32 %v1229, %v1744
        %v1747 = vmul.f32 %v1232, %v1744
        %v1748 = vmul.f32 %v1237, %v1744
        %v1749 = vmul.f32 %v1240, %v1744
        %v1750 = vmul.f32 %v1245, %v1744
        %v1751 = vmul.f32 %v1248, %v1744
        %v1752 = vmul.f32 %v1253, %v1744
        %v1753 = vmul.f32 %v1256, %v1744
        %v1754 = vmul.f32 %v1261, %v1744
        %v1755 = vmul.f32 %v1264, %v1744
        %v1756 = vmul.f32 %v1269, %v1744
        %v1757 = vmul.f32 %v1272, %v1744
        %v1758 = vmul.f32 %v1277, %v1744
        %v1759 = vmul.f32 %v1280, %v1744
        %v1760 = vmul.f32 %v1285, %v1744
        %v1761 = vmul.f32 %v1288, %v1744
        %v1762 = vmul.f32 %v1293, %v1744
        %v1763 = vmul.f32 %v1296, %v1744
        %v1764 = vmul.f32 %v1301, %v1744
        %v1765 = vmul.f32 %v1304, %v1744
        %v1766 = vmul.f32 %v1309, %v1744
        %v1767 = vmul.f32 %v1312, %v1744
        %v1768 = vmul.f32 %v1317, %v1744
        %v1769 = vmul.f32 %v1320, %v1744
        %v1770 = vmul.f32 %v1325, %v1744
        %v1771 = vmul.f32 %v1328, %v1744
        %v1772 = vmul.f32 %v1333, %v1744
        %v1773 = vmul.f32 %v1336, %v1744
        %v1774 = vmul.f32 %v1341, %v1744
        %v1775 = vmul.f32 %v1344, %v1744
        %v1776 = vmul.f32 %v1349, %v1744
        %v1777 = vmul.f32 %v1352, %v1744
        %v1778 = vmul.f32 %v1357, %v1744
        %v1779 = vmul.f32 %v1360, %v1744
        %v1780 = vmul.f32 %v1365, %v1744
        %v1781 = vmul.f32 %v1368, %v1744
        %v1782 = vmul.f32 %v1373, %v1744
        %v1783 = vmul.f32 %v1376, %v1744
        %v1784 = vmul.f32 %v1381, %v1744
        %v1785 = vmul.f32 %v1384, %v1744
        %v1786 = vmul.f32 %v1389, %v1744
        %v1787 = vmul.f32 %v1392, %v1744
        %v1788 = vmul.f32 %v1397, %v1744
        %v1789 = vmul.f32 %v1400, %v1744
        %v1790 = vmul.f32 %v1405, %v1744
        %v1791 = vmul.f32 %v1408, %v1744
        %v1792 = vmul.f32 %v1413, %v1744
        %v1793 = vmul.f32 %v1416, %v1744
        %v1794 = vmul.f32 %v1421, %v1744
        %v1795 = vmul.f32 %v1424, %v1744
        %v1796 = vmul.f32 %v1429, %v1744
        %v1797 = vmul.f32 %v1432, %v1744
        %v1798 = vmul.f32 %v1437, %v1744
        %v1799 = vmul.f32 %v1440, %v1744
        %v1800 = vmul.f32 %v1445, %v1744
        %v1801 = vmul.f32 %v1448, %v1744
        %v1802 = vmul.f32 %v1453, %v1744
        %v1803 = vmul.f32 %v1456, %v1744
        %v1804 = vmul.f32 %v1461, %v1744
        %v1805 = vmul.f32 %v1464, %v1744
        %v1806 = vmul.f32 %v1469, %v1744
        %v1807 = vmul.f32 %v1472, %v1744
        %v1808 = vmul.f32 %v1477, %v1744
        %v1809 = vmul.f32 %v1480, %v1744
        %v1810 = vmul.f32 %v1485, %v1744
        %v1811 = vmul.f32 %v1488, %v1744
        %v1812 = vmul.f32 %v1493, %v1744
        %v1813 = vmul.f32 %v1496, %v1744
        %v1814 = vmul.f32 %v1501, %v1744
        %v1815 = vmul.f32 %v1504, %v1744
        %v1816 = vmul.f32 %v1509, %v1744
        %v1817 = vmul.f32 %v1512, %v1744
        %v1818 = vmul.f32 %v1517, %v1744
        %v1819 = vmul.f32 %v1520, %v1744
        %v1820 = vmul.f32 %v1525, %v1744
        %v1821 = vmul.f32 %v1528, %v1744
        %v1822 = vmul.f32 %v1533, %v1744
        %v1823 = vmul.f32 %v1536, %v1744
        %v1824 = vmul.f32 %v1541, %v1744
        %v1825 = vmul.f32 %v1544, %v1744
        %v1826 = vmul.f32 %v1549, %v1744
        %v1827 = vmul.f32 %v1552, %v1744
        %v1828 = vmul.f32 %v1557, %v1744
        %v1829 = vmul.f32 %v1560, %v1744
        %v1830 = vmul.f32 %v1565, %v1744
        %v1831 = vmul.f32 %v1568, %v1744
        %v1832 = vmul.f32 %v1573, %v1744
        %v1833 = vmul.f32 %v1576, %v1744
        %v1834 = vmul.f32 %v1581, %v1744
        %v1835 = vmul.f32 %v1584, %v1744
        %v1836 = vmul.f32 %v1589, %v1744
        %v1837 = vmul.f32 %v1592, %v1744
        %v1838 = vmul.f32 %v1597, %v1744
        %v1839 = vmul.f32 %v1600, %v1744
        %v1840 = vmul.f32 %v1605, %v1744
        %v1841 = vmul.f32 %v1608, %v1744
        %v1842 = vmul.f32 %v1613, %v1744
        %v1843 = vmul.f32 %v1616, %v1744
        %v1844 = vmul.f32 %v1621, %v1744
        %v1845 = vmul.f32 %v1624, %v1744
        %v1846 = vmul.f32 %v1629, %v1744
        %v1847 = vmul.f32 %v1632, %v1744
        %v1848 = vmul.f32 %v1637, %v1744
        %v1849 = vmul.f32 %v1640, %v1744
        %v1850 = vmul.f32 %v1645, %v1744
        %v1851 = vmul.f32 %v1648, %v1744
        %v1852 = vmul.f32 %v1653, %v1744
        %v1853 = vmul.f32 %v1656, %v1744
        %v1854 = vmul.f32 %v1661, %v1744
        %v1855 = vmul.f32 %v1664, %v1744
        %v1856 = vmul.f32 %v1669, %v1744
        %v1857 = vmul.f32 %v1672, %v1744
        %v1858 = vmul.f32 %v1677, %v1744
        %v1859 = vmul.f32 %v1680, %v1744
        %v1860 = vmul.f32 %v1685, %v1744
        %v1861 = vmul.f32 %v1688, %v1744
        %v1862 = vmul.f32 %v1693, %v1744
        %v1863 = vmul.f32 %v1696, %v1744
        %v1864 = vmul.f32 %v1701, %v1744
        %v1865 = vmul.f32 %v1704, %v1744
        %v1866 = vmul.f32 %v1709, %v1744
        %v1867 = vmul.f32 %v1712, %v1744
        %v1868 = vmul.f32 %v1717, %v1744
        %v1869 = vmul.f32 %v1720, %v1744
        %v1870 = vmul.f32 %v1725, %v1744
        %v1871 = vmul.f32 %v1728, %v1744
        %v1872 = vmul.f32 %v1733, %v1744
        %v1873 = vmul.f32 %v1736, %v1744
        %v1874 = vld [vmem:[#allocation6] sm:$0x1]
        %v1876 = vlaneseq
        %v1877 = vshrl.u32 %v1876, 7
        %v1878 = vsub.s32 0, %v1877
        %v1879 = vrot.slane %v1874, %v1878
        %v1881 = vadd.f32 %v1746, %v1879
        %v1882 = vadd.f32 %v1747, %v1879
        %v1883 = vadd.f32 %v1748, %v1879
        %v1884 = vadd.f32 %v1749, %v1879
        %v1885 = vadd.f32 %v1750, %v1879
        %v1886 = vadd.f32 %v1751, %v1879
        %v1887 = vadd.f32 %v1752, %v1879
        %v1888 = vadd.f32 %v1753, %v1879
        %v1889 = vadd.f32 %v1754, %v1879
        %v1890 = vadd.f32 %v1755, %v1879
        %v1891 = vadd.f32 %v1756, %v1879
        %v1892 = vadd.f32 %v1757, %v1879
        %v1893 = vadd.f32 %v1758, %v1879
        %v1894 = vadd.f32 %v1759, %v1879
        %v1895 = vadd.f32 %v1760, %v1879
        %v1896 = vadd.f32 %v1761, %v1879
        %v1897 = vadd.f32 %v1762, %v1879
        %v1898 = vadd.f32 %v1763, %v1879
        %v1899 = vadd.f32 %v1764, %v1879
        %v1900 = vadd.f32 %v1765, %v1879
        %v1901 = vadd.f32 %v1766, %v1879
        %v1902 = vadd.f32 %v1767, %v1879
        %v1903 = vadd.f32 %v1768, %v1879
        %v1904 = vadd.f32 %v1769, %v1879
        %v1905 = vadd.f32 %v1770, %v1879
        %v1906 = vadd.f32 %v1771, %v1879
        %v1907 = vadd.f32 %v1772, %v1879
        %v1908 = vadd.f32 %v1773, %v1879
        %v1909 = vadd.f32 %v1774, %v1879
        %v1910 = vadd.f32 %v1775, %v1879
        %v1911 = vadd.f32 %v1776, %v1879
        %v1912 = vadd.f32 %v1777, %v1879
        %v1913 = vadd.f32 %v1778, %v1879
        %v1914 = vadd.f32 %v1779, %v1879
        %v1915 = vadd.f32 %v1780, %v1879
        %v1916 = vadd.f32 %v1781, %v1879
        %v1917 = vadd.f32 %v1782, %v1879
        %v1918 = vadd.f32 %v1783, %v1879
        %v1919 = vadd.f32 %v1784, %v1879
        %v1920 = vadd.f32 %v1785, %v1879
        %v1921 = vadd.f32 %v1786, %v1879
        %v1922 = vadd.f32 %v1787, %v1879
        %v1923 = vadd.f32 %v1788, %v1879
        %v1924 = vadd.f32 %v1789, %v1879
        %v1925 = vadd.f32 %v1790, %v1879
        %v1926 = vadd.f32 %v1791, %v1879
        %v1927 = vadd.f32 %v1792, %v1879
        %v1928 = vadd.f32 %v1793, %v1879
        %v1929 = vadd.f32 %v1794, %v1879
        %v1930 = vadd.f32 %v1795, %v1879
        %v1931 = vadd.f32 %v1796, %v1879
        %v1932 = vadd.f32 %v1797, %v1879
        %v1933 = vadd.f32 %v1798, %v1879
        %v1934 = vadd.f32 %v1799, %v1879
        %v1935 = vadd.f32 %v1800, %v1879
        %v1936 = vadd.f32 %v1801, %v1879
        %v1937 = vadd.f32 %v1802, %v1879
        %v1938 = vadd.f32 %v1803, %v1879
        %v1939 = vadd.f32 %v1804, %v1879
        %v1940 = vadd.f32 %v1805, %v1879
        %v1941 = vadd.f32 %v1806, %v1879
        %v1942 = vadd.f32 %v1807, %v1879
        %v1943 = vadd.f32 %v1808, %v1879
        %v1944 = vadd.f32 %v1809, %v1879
        %v1945 = vadd.f32 %v1810, %v1879
        %v1946 = vadd.f32 %v1811, %v1879
        %v1947 = vadd.f32 %v1812, %v1879
        %v1948 = vadd.f32 %v1813, %v1879
        %v1949 = vadd.f32 %v1814, %v1879
        %v1950 = vadd.f32 %v1815, %v1879
        %v1951 = vadd.f32 %v1816, %v1879
        %v1952 = vadd.f32 %v1817, %v1879
        %v1953 = vadd.f32 %v1818, %v1879
        %v1954 = vadd.f32 %v1819, %v1879
        %v1955 = vadd.f32 %v1820, %v1879
        %v1956 = vadd.f32 %v1821, %v1879
        %v1957 = vadd.f32 %v1822, %v1879
        %v1958 = vadd.f32 %v1823, %v1879
        %v1959 = vadd.f32 %v1824, %v1879
        %v1960 = vadd.f32 %v1825, %v1879
        %v1961 = vadd.f32 %v1826, %v1879
        %v1962 = vadd.f32 %v1827, %v1879
        %v1963 = vadd.f32 %v1828, %v1879
        %v1964 = vadd.f32 %v1829, %v1879
        %v1965 = vadd.f32 %v1830, %v1879
        %v1966 = vadd.f32 %v1831, %v1879
        %v1967 = vadd.f32 %v1832, %v1879
        %v1968 = vadd.f32 %v1833, %v1879
        %v1969 = vadd.f32 %v1834, %v1879
        %v1970 = vadd.f32 %v1835, %v1879
        %v1971 = vadd.f32 %v1836, %v1879
        %v1972 = vadd.f32 %v1837, %v1879
        %v1973 = vadd.f32 %v1838, %v1879
        %v1974 = vadd.f32 %v1839, %v1879
        %v1975 = vadd.f32 %v1840, %v1879
        %v1976 = vadd.f32 %v1841, %v1879
        %v1977 = vadd.f32 %v1842, %v1879
        %v1978 = vadd.f32 %v1843, %v1879
        %v1979 = vadd.f32 %v1844, %v1879
        %v1980 = vadd.f32 %v1845, %v1879
        %v1981 = vadd.f32 %v1846, %v1879
        %v1982 = vadd.f32 %v1847, %v1879
        %v1983 = vadd.f32 %v1848, %v1879
        %v1984 = vadd.f32 %v1849, %v1879
        %v1985 = vadd.f32 %v1850, %v1879
        %v1986 = vadd.f32 %v1851, %v1879
        %v1987 = vadd.f32 %v1852, %v1879
        %v1988 = vadd.f32 %v1853, %v1879
        %v1989 = vadd.f32 %v1854, %v1879
        %v1990 = vadd.f32 %v1855, %v1879
        %v1991 = vadd.f32 %v1856, %v1879
        %v1992 = vadd.f32 %v1857, %v1879
        %v1993 = vadd.f32 %v1858, %v1879
        %v1994 = vadd.f32 %v1859, %v1879
        %v1995 = vadd.f32 %v1860, %v1879
        %v1996 = vadd.f32 %v1861, %v1879
        %v1997 = vadd.f32 %v1862, %v1879
        %v1998 = vadd.f32 %v1863, %v1879
        %v1999 = vadd.f32 %v1864, %v1879
        %v2000 = vadd.f32 %v1865, %v1879
        %v2001 = vadd.f32 %v1866, %v1879
        %v2002 = vadd.f32 %v1867, %v1879
        %v2003 = vadd.f32 %v1868, %v1879
        %v2004 = vadd.f32 %v1869, %v1879
        %v2005 = vadd.f32 %v1870, %v1879
        %v2006 = vadd.f32 %v1871, %v1879
        %v2007 = vadd.f32 %v1872, %v1879
        %v2008 = vadd.f32 %v1873, %v1879
        %v2009 = vmax.f32 %v1881, 0.0
        %v2010 = vmax.f32 %v1882, 0.0
        %v2011 = vmax.f32 %v1883, 0.0
        %v2012 = vmax.f32 %v1884, 0.0
        %v2013 = vmax.f32 %v1885, 0.0
        %v2014 = vmax.f32 %v1886, 0.0
        %v2015 = vmax.f32 %v1887, 0.0
        %v2016 = vmax.f32 %v1888, 0.0
        %v2017 = vmax.f32 %v1889, 0.0
        %v2018 = vmax.f32 %v1890, 0.0
        %v2019 = vmax.f32 %v1891, 0.0
        %v2020 = vmax.f32 %v1892, 0.0
        %v2021 = vmax.f32 %v1893, 0.0
        %v2022 = vmax.f32 %v1894, 0.0
        %v2023 = vmax.f32 %v1895, 0.0
        %v2024 = vmax.f32 %v1896, 0.0
        %v2025 = vmax.f32 %v1897, 0.0
        %v2026 = vmax.f32 %v1898, 0.0
        %v2027 = vmax.f32 %v1899, 0.0
        %v2028 = vmax.f32 %v1900, 0.0
        %v2029 = vmax.f32 %v1901, 0.0
        %v2030 = vmax.f32 %v1902, 0.0
        %v2031 = vmax.f32 %v1903, 0.0
        %v2032 = vmax.f32 %v1904, 0.0
        %v2033 = vmax.f32 %v1905, 0.0
        %v2034 = vmax.f32 %v1906, 0.0
        %v2035 = vmax.f32 %v1907, 0.0
        %v2036 = vmax.f32 %v1908, 0.0
        %v2037 = vmax.f32 %v1909, 0.0
        %v2038 = vmax.f32 %v1910, 0.0
        %v2039 = vmax.f32 %v1911, 0.0
        %v2040 = vmax.f32 %v1912, 0.0
        %v2041 = vmax.f32 %v1913, 0.0
        %v2042 = vmax.f32 %v1914, 0.0
        %v2043 = vmax.f32 %v1915, 0.0
        %v2044 = vmax.f32 %v1916, 0.0
        %v2045 = vmax.f32 %v1917, 0.0
        %v2046 = vmax.f32 %v1918, 0.0
        %v2047 = vmax.f32 %v1919, 0.0
        %v2048 = vmax.f32 %v1920, 0.0
        %v2049 = vmax.f32 %v1921, 0.0
        %v2050 = vmax.f32 %v1922, 0.0
        %v2051 = vmax.f32 %v1923, 0.0
        %v2052 = vmax.f32 %v1924, 0.0
        %v2053 = vmax.f32 %v1925, 0.0
        %v2054 = vmax.f32 %v1926, 0.0
        %v2055 = vmax.f32 %v1927, 0.0
        %v2056 = vmax.f32 %v1928, 0.0
        %v2057 = vmax.f32 %v1929, 0.0
        %v2058 = vmax.f32 %v1930, 0.0
        %v2059 = vmax.f32 %v1931, 0.0
        %v2060 = vmax.f32 %v1932, 0.0
        %v2061 = vmax.f32 %v1933, 0.0
        %v2062 = vmax.f32 %v1934, 0.0
        %v2063 = vmax.f32 %v1935, 0.0
        %v2064 = vmax.f32 %v1936, 0.0
        %v2065 = vmax.f32 %v1937, 0.0
        %v2066 = vmax.f32 %v1938, 0.0
        %v2067 = vmax.f32 %v1939, 0.0
        %v2068 = vmax.f32 %v1940, 0.0
        %v2069 = vmax.f32 %v1941, 0.0
        %v2070 = vmax.f32 %v1942, 0.0
        %v2071 = vmax.f32 %v1943, 0.0
        %v2072 = vmax.f32 %v1944, 0.0
        %v2073 = vmax.f32 %v1945, 0.0
        %v2074 = vmax.f32 %v1946, 0.0
        %v2075 = vmax.f32 %v1947, 0.0
        %v2076 = vmax.f32 %v1948, 0.0
        %v2077 = vmax.f32 %v1949, 0.0
        %v2078 = vmax.f32 %v1950, 0.0
        %v2079 = vmax.f32 %v1951, 0.0
        %v2080 = vmax.f32 %v1952, 0.0
        %v2081 = vmax.f32 %v1953, 0.0
        %v2082 = vmax.f32 %v1954, 0.0
        %v2083 = vmax.f32 %v1955, 0.0
        %v2084 = vmax.f32 %v1956, 0.0
        %v2085 = vmax.f32 %v1957, 0.0
        %v2086 = vmax.f32 %v1958, 0.0
        %v2087 = vmax.f32 %v1959, 0.0
        %v2088 = vmax.f32 %v1960, 0.0
        %v2089 = vmax.f32 %v1961, 0.0
        %v2090 = vmax.f32 %v1962, 0.0
        %v2091 = vmax.f32 %v1963, 0.0
        %v2092 = vmax.f32 %v1964, 0.0
        %v2093 = vmax.f32 %v1965, 0.0
        %v2094 = vmax.f32 %v1966, 0.0
        %v2095 = vmax.f32 %v1967, 0.0
        %v2096 = vmax.f32 %v1968, 0.0
        %v2097 = vmax.f32 %v1969, 0.0
        %v2098 = vmax.f32 %v1970, 0.0
        %v2099 = vmax.f32 %v1971, 0.0
        %v2100 = vmax.f32 %v1972, 0.0
        %v2101 = vmax.f32 %v1973, 0.0
        %v2102 = vmax.f32 %v1974, 0.0
        %v2103 = vmax.f32 %v1975, 0.0
        %v2104 = vmax.f32 %v1976, 0.0
        %v2105 = vmax.f32 %v1977, 0.0
        %v2106 = vmax.f32 %v1978, 0.0
        %v2107 = vmax.f32 %v1979, 0.0
        %v2108 = vmax.f32 %v1980, 0.0
        %v2109 = vmax.f32 %v1981, 0.0
        %v2110 = vmax.f32 %v1982, 0.0
        %v2111 = vmax.f32 %v1983, 0.0
        %v2112 = vmax.f32 %v1984, 0.0
        %v2113 = vmax.f32 %v1985, 0.0
        %v2114 = vmax.f32 %v1986, 0.0
        %v2115 = vmax.f32 %v1987, 0.0
        %v2116 = vmax.f32 %v1988, 0.0
        %v2117 = vmax.f32 %v1989, 0.0
        %v2118 = vmax.f32 %v1990, 0.0
        %v2119 = vmax.f32 %v1991, 0.0
        %v2120 = vmax.f32 %v1992, 0.0
        %v2121 = vmax.f32 %v1993, 0.0
        %v2122 = vmax.f32 %v1994, 0.0
        %v2123 = vmax.f32 %v1995, 0.0
        %v2124 = vmax.f32 %v1996, 0.0
        %v2125 = vmax.f32 %v1997, 0.0
        %v2126 = vmax.f32 %v1998, 0.0
        %v2127 = vmax.f32 %v1999, 0.0
        %v2128 = vmax.f32 %v2000, 0.0
        %v2129 = vmax.f32 %v2001, 0.0
        %v2130 = vmax.f32 %v2002, 0.0
        %v2131 = vmax.f32 %v2003, 0.0
        %v2132 = vmax.f32 %v2004, 0.0
        %v2133 = vmax.f32 %v2005, 0.0
        %v2134 = vmax.f32 %v2006, 0.0
        %v2135 = vmax.f32 %v2007, 0.0
        %v2136 = vmax.f32 %v2008, 0.0
        %v2137 = vpack.c.bf16 %v2010, %v2009
        %v2138 = vpack.c.bf16 %v2012, %v2011
        %v2139 = vpack.c.bf16 %v2014, %v2013
        %v2140 = vpack.c.bf16 %v2016, %v2015
        %v2141 = vpack.c.bf16 %v2018, %v2017
        %v2142 = vpack.c.bf16 %v2020, %v2019
        %v2143 = vpack.c.bf16 %v2022, %v2021
        %v2144 = vpack.c.bf16 %v2024, %v2023
        %v2145 = vpack.c.bf16 %v2026, %v2025
        %v2146 = vpack.c.bf16 %v2028, %v2027
        %v2147 = vpack.c.bf16 %v2030, %v2029
        %v2148 = vpack.c.bf16 %v2032, %v2031
        %v2149 = vpack.c.bf16 %v2034, %v2033
        %v2150 = vpack.c.bf16 %v2036, %v2035
        %v2151 = vpack.c.bf16 %v2038, %v2037
        %v2152 = vpack.c.bf16 %v2040, %v2039
        %v2153 = vpack.c.bf16 %v2042, %v2041
        %v2154 = vpack.c.bf16 %v2044, %v2043
        %v2155 = vpack.c.bf16 %v2046, %v2045
        %v2156 = vpack.c.bf16 %v2048, %v2047
        %v2157 = vpack.c.bf16 %v2050, %v2049
        %v2158 = vpack.c.bf16 %v2052, %v2051
        %v2159 = vpack.c.bf16 %v2054, %v2053
        %v2160 = vpack.c.bf16 %v2056, %v2055
        %v2161 = vpack.c.bf16 %v2058, %v2057
        %v2162 = vpack.c.bf16 %v2060, %v2059
        %v2163 = vpack.c.bf16 %v2062, %v2061
        %v2164 = vpack.c.bf16 %v2064, %v2063
        %v2165 = vpack.c.bf16 %v2066, %v2065
        %v2166 = vpack.c.bf16 %v2068, %v2067
        %v2167 = vpack.c.bf16 %v2070, %v2069
        %v2168 = vpack.c.bf16 %v2072, %v2071
        %v2169 = vpack.c.bf16 %v2074, %v2073
        %v2170 = vpack.c.bf16 %v2076, %v2075
        %v2171 = vpack.c.bf16 %v2078, %v2077
        %v2172 = vpack.c.bf16 %v2080, %v2079
        %v2173 = vpack.c.bf16 %v2082, %v2081
        %v2174 = vpack.c.bf16 %v2084, %v2083
        %v2175 = vpack.c.bf16 %v2086, %v2085
        %v2176 = vpack.c.bf16 %v2088, %v2087
        %v2177 = vpack.c.bf16 %v2090, %v2089
        %v2178 = vpack.c.bf16 %v2092, %v2091
        %v2179 = vpack.c.bf16 %v2094, %v2093
        %v2180 = vpack.c.bf16 %v2096, %v2095
        %v2181 = vpack.c.bf16 %v2098, %v2097
        %v2182 = vpack.c.bf16 %v2100, %v2099
        %v2183 = vpack.c.bf16 %v2102, %v2101
        %v2184 = vpack.c.bf16 %v2104, %v2103
        %v2185 = vpack.c.bf16 %v2106, %v2105
        %v2186 = vpack.c.bf16 %v2108, %v2107
        %v2187 = vpack.c.bf16 %v2110, %v2109
        %v2188 = vpack.c.bf16 %v2112, %v2111
        %v2189 = vpack.c.bf16 %v2114, %v2113
        %v2190 = vpack.c.bf16 %v2116, %v2115
        %v2191 = vpack.c.bf16 %v2118, %v2117
        %v2192 = vpack.c.bf16 %v2120, %v2119
        %v2193 = vpack.c.bf16 %v2122, %v2121
        %v2194 = vpack.c.bf16 %v2124, %v2123
        %v2195 = vpack.c.bf16 %v2126, %v2125
        %v2196 = vpack.c.bf16 %v2128, %v2127
        %v2197 = vpack.c.bf16 %v2130, %v2129
        %v2198 = vpack.c.bf16 %v2132, %v2131
        %v2199 = vpack.c.bf16 %v2134, %v2133
        %v2200 = vpack.c.bf16 %v2136, %v2135
        %v2265 = vunpack.c.l.b16 %v2137
        %v2266 = vunpack.c.h.b16 %v2137
        %v2267 = vunpack.c.l.b16 %v2138
        %v2268 = vunpack.c.h.b16 %v2138
        %v2269 = vunpack.c.l.b16 %v2139
        %v2270 = vunpack.c.h.b16 %v2139
        %v2271 = vunpack.c.l.b16 %v2140
        %v2272 = vunpack.c.h.b16 %v2140
        %v2273 = vunpack.c.l.b16 %v2141
        %v2274 = vunpack.c.h.b16 %v2141
        %v2275 = vunpack.c.l.b16 %v2142
        %v2276 = vunpack.c.h.b16 %v2142
        %v2277 = vunpack.c.l.b16 %v2143
        %v2278 = vunpack.c.h.b16 %v2143
        %v2279 = vunpack.c.l.b16 %v2144
        %v2280 = vunpack.c.h.b16 %v2144
        %v2281 = vunpack.c.l.b16 %v2145
        %v2282 = vunpack.c.h.b16 %v2145
        %v2283 = vunpack.c.l.b16 %v2146
        %v2284 = vunpack.c.h.b16 %v2146
        %v2285 = vunpack.c.l.b16 %v2147
        %v2286 = vunpack.c.h.b16 %v2147
        %v2287 = vunpack.c.l.b16 %v2148
        %v2288 = vunpack.c.h.b16 %v2148
        %v2289 = vunpack.c.l.b16 %v2149
        %v2290 = vunpack.c.h.b16 %v2149
        %v2291 = vunpack.c.l.b16 %v2150
        %v2292 = vunpack.c.h.b16 %v2150
        %v2293 = vunpack.c.l.b16 %v2151
        %v2294 = vunpack.c.h.b16 %v2151
        %v2295 = vunpack.c.l.b16 %v2152
        %v2296 = vunpack.c.h.b16 %v2152
        %v2297 = vunpack.c.l.b16 %v2153
        %v2298 = vunpack.c.h.b16 %v2153
        %v2299 = vunpack.c.l.b16 %v2154
        %v2300 = vunpack.c.h.b16 %v2154
        %v2301 = vunpack.c.l.b16 %v2155
        %v2302 = vunpack.c.h.b16 %v2155
        %v2303 = vunpack.c.l.b16 %v2156
        %v2304 = vunpack.c.h.b16 %v2156
        %v2305 = vunpack.c.l.b16 %v2157
        %v2306 = vunpack.c.h.b16 %v2157
        %v2307 = vunpack.c.l.b16 %v2158
        %v2308 = vunpack.c.h.b16 %v2158
        %v2309 = vunpack.c.l.b16 %v2159
        %v2310 = vunpack.c.h.b16 %v2159
        %v2311 = vunpack.c.l.b16 %v2160
        %v2312 = vunpack.c.h.b16 %v2160
        %v2313 = vunpack.c.l.b16 %v2161
        %v2314 = vunpack.c.h.b16 %v2161
        %v2315 = vunpack.c.l.b16 %v2162
        %v2316 = vunpack.c.h.b16 %v2162
        %v2317 = vunpack.c.l.b16 %v2163
        %v2318 = vunpack.c.h.b16 %v2163
        %v2319 = vunpack.c.l.b16 %v2164
        %v2320 = vunpack.c.h.b16 %v2164
        %v2321 = vunpack.c.l.b16 %v2165
        %v2322 = vunpack.c.h.b16 %v2165
        %v2323 = vunpack.c.l.b16 %v2166
        %v2324 = vunpack.c.h.b16 %v2166
        %v2325 = vunpack.c.l.b16 %v2167
        %v2326 = vunpack.c.h.b16 %v2167
        %v2327 = vunpack.c.l.b16 %v2168
        %v2328 = vunpack.c.h.b16 %v2168
        %v2329 = vunpack.c.l.b16 %v2169
        %v2330 = vunpack.c.h.b16 %v2169
        %v2331 = vunpack.c.l.b16 %v2170
        %v2332 = vunpack.c.h.b16 %v2170
        %v2333 = vunpack.c.l.b16 %v2171
        %v2334 = vunpack.c.h.b16 %v2171
        %v2335 = vunpack.c.l.b16 %v2172
        %v2336 = vunpack.c.h.b16 %v2172
        %v2337 = vunpack.c.l.b16 %v2173
        %v2338 = vunpack.c.h.b16 %v2173
        %v2339 = vunpack.c.l.b16 %v2174
        %v2340 = vunpack.c.h.b16 %v2174
        %v2341 = vunpack.c.l.b16 %v2175
        %v2342 = vunpack.c.h.b16 %v2175
        %v2343 = vunpack.c.l.b16 %v2176
        %v2344 = vunpack.c.h.b16 %v2176
        %v2345 = vunpack.c.l.b16 %v2177
        %v2346 = vunpack.c.h.b16 %v2177
        %v2347 = vunpack.c.l.b16 %v2178
        %v2348 = vunpack.c.h.b16 %v2178
        %v2349 = vunpack.c.l.b16 %v2179
        %v2350 = vunpack.c.h.b16 %v2179
        %v2351 = vunpack.c.l.b16 %v2180
        %v2352 = vunpack.c.h.b16 %v2180
        %v2353 = vunpack.c.l.b16 %v2181
        %v2354 = vunpack.c.h.b16 %v2181
        %v2355 = vunpack.c.l.b16 %v2182
        %v2356 = vunpack.c.h.b16 %v2182
        %v2357 = vunpack.c.l.b16 %v2183
        %v2358 = vunpack.c.h.b16 %v2183
        %v2359 = vunpack.c.l.b16 %v2184
        %v2360 = vunpack.c.h.b16 %v2184
        %v2361 = vunpack.c.l.b16 %v2185
        %v2362 = vunpack.c.h.b16 %v2185
        %v2363 = vunpack.c.l.b16 %v2186
        %v2364 = vunpack.c.h.b16 %v2186
        %v2365 = vunpack.c.l.b16 %v2187
        %v2366 = vunpack.c.h.b16 %v2187
        %v2367 = vunpack.c.l.b16 %v2188
        %v2368 = vunpack.c.h.b16 %v2188
        %v2369 = vunpack.c.l.b16 %v2189
        %v2370 = vunpack.c.h.b16 %v2189
        %v2371 = vunpack.c.l.b16 %v2190
        %v2372 = vunpack.c.h.b16 %v2190
        %v2373 = vunpack.c.l.b16 %v2191
        %v2374 = vunpack.c.h.b16 %v2191
        %v2375 = vunpack.c.l.b16 %v2192
        %v2376 = vunpack.c.h.b16 %v2192
        %v2377 = vunpack.c.l.b16 %v2193
        %v2378 = vunpack.c.h.b16 %v2193
        %v2379 = vunpack.c.l.b16 %v2194
        %v2380 = vunpack.c.h.b16 %v2194
        %v2381 = vunpack.c.l.b16 %v2195
        %v2382 = vunpack.c.h.b16 %v2195
        %v2383 = vunpack.c.l.b16 %v2196
        %v2384 = vunpack.c.h.b16 %v2196
        %v2385 = vunpack.c.l.b16 %v2197
        %v2386 = vunpack.c.h.b16 %v2197
        %v2387 = vunpack.c.l.b16 %v2198
        %v2388 = vunpack.c.h.b16 %v2198
        %v2389 = vunpack.c.l.b16 %v2199
        %v2390 = vunpack.c.h.b16 %v2199
        %v2391 = vunpack.c.l.b16 %v2200
        %v2392 = vunpack.c.h.b16 %v2200
        %v2393 = vpack.c.b16 %v2265, %v2265
        %v2394 = vpack.c.b16 %v2266, %v2266
        %v2395 = vpack.c.b16 %v2267, %v2267
        %v2396 = vpack.c.b16 %v2268, %v2268
        %v2397 = vpack.c.b16 %v2269, %v2269
        %v2398 = vpack.c.b16 %v2270, %v2270
        %v2399 = vpack.c.b16 %v2271, %v2271
        %v2400 = vpack.c.b16 %v2272, %v2272
        %v2401 = vpack.c.b16 %v2273, %v2273
        %v2402 = vpack.c.b16 %v2274, %v2274
        %v2403 = vpack.c.b16 %v2275, %v2275
        %v2404 = vpack.c.b16 %v2276, %v2276
        %v2405 = vpack.c.b16 %v2277, %v2277
        %v2406 = vpack.c.b16 %v2278, %v2278
        %v2407 = vpack.c.b16 %v2279, %v2279
        %v2408 = vpack.c.b16 %v2280, %v2280
        %v2409 = vpack.c.b16 %v2281, %v2281
        %v2410 = vpack.c.b16 %v2282, %v2282
        %v2411 = vpack.c.b16 %v2283, %v2283
        %v2412 = vpack.c.b16 %v2284, %v2284
        %v2413 = vpack.c.b16 %v2285, %v2285
        %v2414 = vpack.c.b16 %v2286, %v2286
        %v2415 = vpack.c.b16 %v2287, %v2287
        %v2416 = vpack.c.b16 %v2288, %v2288
        %v2417 = vpack.c.b16 %v2289, %v2289
        %v2418 = vpack.c.b16 %v2290, %v2290
        %v2419 = vpack.c.b16 %v2291, %v2291
        %v2420 = vpack.c.b16 %v2292, %v2292
        %v2421 = vpack.c.b16 %v2293, %v2293
        %v2422 = vpack.c.b16 %v2294, %v2294
        %v2423 = vpack.c.b16 %v2295, %v2295
        %v2424 = vpack.c.b16 %v2296, %v2296
        %v2425 = vpack.c.b16 %v2297, %v2297
        %v2426 = vpack.c.b16 %v2298, %v2298
        %v2427 = vpack.c.b16 %v2299, %v2299
        %v2428 = vpack.c.b16 %v2300, %v2300
        %v2429 = vpack.c.b16 %v2301, %v2301
        %v2430 = vpack.c.b16 %v2302, %v2302
        %v2431 = vpack.c.b16 %v2303, %v2303
        %v2432 = vpack.c.b16 %v2304, %v2304
        %v2433 = vpack.c.b16 %v2305, %v2305
        %v2434 = vpack.c.b16 %v2306, %v2306
        %v2435 = vpack.c.b16 %v2307, %v2307
        %v2436 = vpack.c.b16 %v2308, %v2308
        %v2437 = vpack.c.b16 %v2309, %v2309
        %v2438 = vpack.c.b16 %v2310, %v2310
        %v2439 = vpack.c.b16 %v2311, %v2311
        %v2440 = vpack.c.b16 %v2312, %v2312
        %v2441 = vpack.c.b16 %v2313, %v2313
        %v2442 = vpack.c.b16 %v2314, %v2314
        %v2443 = vpack.c.b16 %v2315, %v2315
        %v2444 = vpack.c.b16 %v2316, %v2316
        %v2445 = vpack.c.b16 %v2317, %v2317
        %v2446 = vpack.c.b16 %v2318, %v2318
        %v2447 = vpack.c.b16 %v2319, %v2319
        %v2448 = vpack.c.b16 %v2320, %v2320
        %v2449 = vpack.c.b16 %v2321, %v2321
        %v2450 = vpack.c.b16 %v2322, %v2322
        %v2451 = vpack.c.b16 %v2323, %v2323
        %v2452 = vpack.c.b16 %v2324, %v2324
        %v2453 = vpack.c.b16 %v2325, %v2325
        %v2454 = vpack.c.b16 %v2326, %v2326
        %v2455 = vpack.c.b16 %v2327, %v2327
        %v2456 = vpack.c.b16 %v2328, %v2328
        %v2457 = vpack.c.b16 %v2329, %v2329
        %v2458 = vpack.c.b16 %v2330, %v2330
        %v2459 = vpack.c.b16 %v2331, %v2331
        %v2460 = vpack.c.b16 %v2332, %v2332
        %v2461 = vpack.c.b16 %v2333, %v2333
        %v2462 = vpack.c.b16 %v2334, %v2334
        %v2463 = vpack.c.b16 %v2335, %v2335
        %v2464 = vpack.c.b16 %v2336, %v2336
        %v2465 = vpack.c.b16 %v2337, %v2337
        %v2466 = vpack.c.b16 %v2338, %v2338
        %v2467 = vpack.c.b16 %v2339, %v2339
        %v2468 = vpack.c.b16 %v2340, %v2340
        %v2469 = vpack.c.b16 %v2341, %v2341
        %v2470 = vpack.c.b16 %v2342, %v2342
        %v2471 = vpack.c.b16 %v2343, %v2343
        %v2472 = vpack.c.b16 %v2344, %v2344
        %v2473 = vpack.c.b16 %v2345, %v2345
        %v2474 = vpack.c.b16 %v2346, %v2346
        %v2475 = vpack.c.b16 %v2347, %v2347
        %v2476 = vpack.c.b16 %v2348, %v2348
        %v2477 = vpack.c.b16 %v2349, %v2349
        %v2478 = vpack.c.b16 %v2350, %v2350
        %v2479 = vpack.c.b16 %v2351, %v2351
        %v2480 = vpack.c.b16 %v2352, %v2352
        %v2481 = vpack.c.b16 %v2353, %v2353
        %v2482 = vpack.c.b16 %v2354, %v2354
        %v2483 = vpack.c.b16 %v2355, %v2355
        %v2484 = vpack.c.b16 %v2356, %v2356
        %v2485 = vpack.c.b16 %v2357, %v2357
        %v2486 = vpack.c.b16 %v2358, %v2358
        %v2487 = vpack.c.b16 %v2359, %v2359
        %v2488 = vpack.c.b16 %v2360, %v2360
        %v2489 = vpack.c.b16 %v2361, %v2361
        %v2490 = vpack.c.b16 %v2362, %v2362
        %v2491 = vpack.c.b16 %v2363, %v2363
        %v2492 = vpack.c.b16 %v2364, %v2364
        %v2493 = vpack.c.b16 %v2365, %v2365
        %v2494 = vpack.c.b16 %v2366, %v2366
        %v2495 = vpack.c.b16 %v2367, %v2367
        %v2496 = vpack.c.b16 %v2368, %v2368
        %v2497 = vpack.c.b16 %v2369, %v2369
        %v2498 = vpack.c.b16 %v2370, %v2370
        %v2499 = vpack.c.b16 %v2371, %v2371
        %v2500 = vpack.c.b16 %v2372, %v2372
        %v2501 = vpack.c.b16 %v2373, %v2373
        %v2502 = vpack.c.b16 %v2374, %v2374
        %v2503 = vpack.c.b16 %v2375, %v2375
        %v2504 = vpack.c.b16 %v2376, %v2376
        %v2505 = vpack.c.b16 %v2377, %v2377
        %v2506 = vpack.c.b16 %v2378, %v2378
        %v2507 = vpack.c.b16 %v2379, %v2379
        %v2508 = vpack.c.b16 %v2380, %v2380
        %v2509 = vpack.c.b16 %v2381, %v2381
        %v2510 = vpack.c.b16 %v2382, %v2382
        %v2511 = vpack.c.b16 %v2383, %v2383
        %v2512 = vpack.c.b16 %v2384, %v2384
        %v2513 = vpack.c.b16 %v2385, %v2385
        %v2514 = vpack.c.b16 %v2386, %v2386
        %v2515 = vpack.c.b16 %v2387, %v2387
        %v2516 = vpack.c.b16 %v2388, %v2388
        %v2517 = vpack.c.b16 %v2389, %v2389
        %v2518 = vpack.c.b16 %v2390, %v2390
        %v2519 = vpack.c.b16 %v2391, %v2391
        %v2520 = vpack.c.b16 %v2392, %v2392
        %vm2649 = vcmask 519168
        %2650 = vst.msk [vmem:[%s295] sm:$0xf] %vm2649, %v2393
        %2651 = vst.msk [vmem:[%s295 + $0x4] sm:$0xf] %vm2649, %v2394
        %2652 = vst.msk [vmem:[%s295 + $0x8] sm:$0xf] %vm2649, %v2395
        %2653 = vst.msk [vmem:[%s295 + $0xc] sm:$0xf] %vm2649, %v2396
        %2654 = vst.msk [vmem:[%s295 + $0x10] sm:$0xf] %vm2649, %v2397
        %2655 = vst.msk [vmem:[%s295 + $0x14] sm:$0xf] %vm2649, %v2398
        %2656 = vst.msk [vmem:[%s295 + $0x18] sm:$0xf] %vm2649, %v2399
        %2657 = vst.msk [vmem:[%s295 + $0x1c] sm:$0xf] %vm2649, %v2400
        %2658 = vst.msk [vmem:[%s295 + $0x20] sm:$0xf] %vm2649, %v2401
        %2659 = vst.msk [vmem:[%s295 + $0x24] sm:$0xf] %vm2649, %v2402
        %2660 = vst.msk [vmem:[%s295 + $0x28] sm:$0xf] %vm2649, %v2403
        %2661 = vst.msk [vmem:[%s295 + $0x2c] sm:$0xf] %vm2649, %v2404
        %2662 = vst.msk [vmem:[%s295 + $0x30] sm:$0xf] %vm2649, %v2405
        %2663 = vst.msk [vmem:[%s295 + $0x34] sm:$0xf] %vm2649, %v2406
        %2664 = vst.msk [vmem:[%s295 + $0x38] sm:$0xf] %vm2649, %v2407
        %2665 = vst.msk [vmem:[%s295 + $0x3c] sm:$0xf] %vm2649, %v2408
        %2666 = vst.msk [vmem:[%s295 + $0x40] sm:$0xf] %vm2649, %v2409
        %2667 = vst.msk [vmem:[%s295 + $0x44] sm:$0xf] %vm2649, %v2410
        %2668 = vst.msk [vmem:[%s295 + $0x48] sm:$0xf] %vm2649, %v2411
        %2669 = vst.msk [vmem:[%s295 + $0x4c] sm:$0xf] %vm2649, %v2412
        %2670 = vst.msk [vmem:[%s295 + $0x50] sm:$0xf] %vm2649, %v2413
        %2671 = vst.msk [vmem:[%s295 + $0x54] sm:$0xf] %vm2649, %v2414
        %2672 = vst.msk [vmem:[%s295 + $0x58] sm:$0xf] %vm2649, %v2415
        %2673 = vst.msk [vmem:[%s295 + $0x5c] sm:$0xf] %vm2649, %v2416
        %2674 = vst.msk [vmem:[%s295 + $0x60] sm:$0xf] %vm2649, %v2417
        %2675 = vst.msk [vmem:[%s295 + $0x64] sm:$0xf] %vm2649, %v2418
        %2676 = vst.msk [vmem:[%s295 + $0x68] sm:$0xf] %vm2649, %v2419
        %2677 = vst.msk [vmem:[%s295 + $0x6c] sm:$0xf] %vm2649, %v2420
        %2678 = vst.msk [vmem:[%s295 + $0x70] sm:$0xf] %vm2649, %v2421
        %2679 = vst.msk [vmem:[%s295 + $0x74] sm:$0xf] %vm2649, %v2422
        %2680 = vst.msk [vmem:[%s295 + $0x78] sm:$0xf] %vm2649, %v2423
        %2681 = vst.msk [vmem:[%s295 + $0x7c] sm:$0xf] %vm2649, %v2424
        %2682 = vst.msk [vmem:[%s295 + $0x80] sm:$0xf] %vm2649, %v2425
        %2683 = vst.msk [vmem:[%s295 + $0x84] sm:$0xf] %vm2649, %v2426
        %2684 = vst.msk [vmem:[%s295 + $0x88] sm:$0xf] %vm2649, %v2427
        %2685 = vst.msk [vmem:[%s295 + $0x8c] sm:$0xf] %vm2649, %v2428
        %2686 = vst.msk [vmem:[%s295 + $0x90] sm:$0xf] %vm2649, %v2429
        %2687 = vst.msk [vmem:[%s295 + $0x94] sm:$0xf] %vm2649, %v2430
        %2688 = vst.msk [vmem:[%s295 + $0x98] sm:$0xf] %vm2649, %v2431
        %2689 = vst.msk [vmem:[%s295 + $0x9c] sm:$0xf] %vm2649, %v2432
        %2690 = vst.msk [vmem:[%s295 + $0xa0] sm:$0xf] %vm2649, %v2433
        %2691 = vst.msk [vmem:[%s295 + $0xa4] sm:$0xf] %vm2649, %v2434
        %2692 = vst.msk [vmem:[%s295 + $0xa8] sm:$0xf] %vm2649, %v2435
        %2693 = vst.msk [vmem:[%s295 + $0xac] sm:$0xf] %vm2649, %v2436
        %2694 = vst.msk [vmem:[%s295 + $0xb0] sm:$0xf] %vm2649, %v2437
        %2695 = vst.msk [vmem:[%s295 + $0xb4] sm:$0xf] %vm2649, %v2438
        %2696 = vst.msk [vmem:[%s295 + $0xb8] sm:$0xf] %vm2649, %v2439
        %2697 = vst.msk [vmem:[%s295 + $0xbc] sm:$0xf] %vm2649, %v2440
        %2698 = vst.msk [vmem:[%s295 + $0xc0] sm:$0xf] %vm2649, %v2441
        %2699 = vst.msk [vmem:[%s295 + $0xc4] sm:$0xf] %vm2649, %v2442
        %2700 = vst.msk [vmem:[%s295 + $0xc8] sm:$0xf] %vm2649, %v2443
        %2701 = vst.msk [vmem:[%s295 + $0xcc] sm:$0xf] %vm2649, %v2444
        %2702 = vst.msk [vmem:[%s295 + $0xd0] sm:$0xf] %vm2649, %v2445
        %2703 = vst.msk [vmem:[%s295 + $0xd4] sm:$0xf] %vm2649, %v2446
        %2704 = vst.msk [vmem:[%s295 + $0xd8] sm:$0xf] %vm2649, %v2447
        %2705 = vst.msk [vmem:[%s295 + $0xdc] sm:$0xf] %vm2649, %v2448
        %2706 = vst.msk [vmem:[%s295 + $0xe0] sm:$0xf] %vm2649, %v2449
        %2707 = vst.msk [vmem:[%s295 + $0xe4] sm:$0xf] %vm2649, %v2450
        %2708 = vst.msk [vmem:[%s295 + $0xe8] sm:$0xf] %vm2649, %v2451
        %2709 = vst.msk [vmem:[%s295 + $0xec] sm:$0xf] %vm2649, %v2452
        %2710 = vst.msk [vmem:[%s295 + $0xf0] sm:$0xf] %vm2649, %v2453
        %2711 = vst.msk [vmem:[%s295 + $0xf4] sm:$0xf] %vm2649, %v2454
        %2712 = vst.msk [vmem:[%s295 + $0xf8] sm:$0xf] %vm2649, %v2455
        %2713 = vst.msk [vmem:[%s295 + $0xfc] sm:$0xf] %vm2649, %v2456
        %2714 = vst.msk [vmem:[%s295 + $0x100] sm:$0xf] %vm2649, %v2457
        %2715 = vst.msk [vmem:[%s295 + $0x104] sm:$0xf] %vm2649, %v2458
        %2716 = vst.msk [vmem:[%s295 + $0x108] sm:$0xf] %vm2649, %v2459
        %2717 = vst.msk [vmem:[%s295 + $0x10c] sm:$0xf] %vm2649, %v2460
        %2718 = vst.msk [vmem:[%s295 + $0x110] sm:$0xf] %vm2649, %v2461
        %2719 = vst.msk [vmem:[%s295 + $0x114] sm:$0xf] %vm2649, %v2462
        %2720 = vst.msk [vmem:[%s295 + $0x118] sm:$0xf] %vm2649, %v2463
        %2721 = vst.msk [vmem:[%s295 + $0x11c] sm:$0xf] %vm2649, %v2464
        %2722 = vst.msk [vmem:[%s295 + $0x120] sm:$0xf] %vm2649, %v2465
        %2723 = vst.msk [vmem:[%s295 + $0x124] sm:$0xf] %vm2649, %v2466
        %2724 = vst.msk [vmem:[%s295 + $0x128] sm:$0xf] %vm2649, %v2467
        %2725 = vst.msk [vmem:[%s295 + $0x12c] sm:$0xf] %vm2649, %v2468
        %2726 = vst.msk [vmem:[%s295 + $0x130] sm:$0xf] %vm2649, %v2469
        %2727 = vst.msk [vmem:[%s295 + $0x134] sm:$0xf] %vm2649, %v2470
        %2728 = vst.msk [vmem:[%s295 + $0x138] sm:$0xf] %vm2649, %v2471
        %2729 = vst.msk [vmem:[%s295 + $0x13c] sm:$0xf] %vm2649, %v2472
        %2730 = vst.msk [vmem:[%s295 + $0x140] sm:$0xf] %vm2649, %v2473
        %2731 = vst.msk [vmem:[%s295 + $0x144] sm:$0xf] %vm2649, %v2474
        %2732 = vst.msk [vmem:[%s295 + $0x148] sm:$0xf] %vm2649, %v2475
        %2733 = vst.msk [vmem:[%s295 + $0x14c] sm:$0xf] %vm2649, %v2476
        %2734 = vst.msk [vmem:[%s295 + $0x150] sm:$0xf] %vm2649, %v2477
        %2735 = vst.msk [vmem:[%s295 + $0x154] sm:$0xf] %vm2649, %v2478
        %2736 = vst.msk [vmem:[%s295 + $0x158] sm:$0xf] %vm2649, %v2479
        %2737 = vst.msk [vmem:[%s295 + $0x15c] sm:$0xf] %vm2649, %v2480
        %2738 = vst.msk [vmem:[%s295 + $0x160] sm:$0xf] %vm2649, %v2481
        %2739 = vst.msk [vmem:[%s295 + $0x164] sm:$0xf] %vm2649, %v2482
        %2740 = vst.msk [vmem:[%s295 + $0x168] sm:$0xf] %vm2649, %v2483
        %2741 = vst.msk [vmem:[%s295 + $0x16c] sm:$0xf] %vm2649, %v2484
        %2742 = vst.msk [vmem:[%s295 + $0x170] sm:$0xf] %vm2649, %v2485
        %2743 = vst.msk [vmem:[%s295 + $0x174] sm:$0xf] %vm2649, %v2486
        %2744 = vst.msk [vmem:[%s295 + $0x178] sm:$0xf] %vm2649, %v2487
        %2745 = vst.msk [vmem:[%s295 + $0x17c] sm:$0xf] %vm2649, %v2488
        %2746 = vst.msk [vmem:[%s295 + $0x180] sm:$0xf] %vm2649, %v2489
        %2747 = vst.msk [vmem:[%s295 + $0x184] sm:$0xf] %vm2649, %v2490
        %2748 = vst.msk [vmem:[%s295 + $0x188] sm:$0xf] %vm2649, %v2491
        %2749 = vst.msk [vmem:[%s295 + $0x18c] sm:$0xf] %vm2649, %v2492
        %2750 = vst.msk [vmem:[%s295 + $0x190] sm:$0xf] %vm2649, %v2493
        %2751 = vst.msk [vmem:[%s295 + $0x194] sm:$0xf] %vm2649, %v2494
        %2752 = vst.msk [vmem:[%s295 + $0x198] sm:$0xf] %vm2649, %v2495
        %2753 = vst.msk [vmem:[%s295 + $0x19c] sm:$0xf] %vm2649, %v2496
        %2754 = vst.msk [vmem:[%s295 + $0x1a0] sm:$0xf] %vm2649, %v2497
        %2755 = vst.msk [vmem:[%s295 + $0x1a4] sm:$0xf] %vm2649, %v2498
        %2756 = vst.msk [vmem:[%s295 + $0x1a8] sm:$0xf] %vm2649, %v2499
        %2757 = vst.msk [vmem:[%s295 + $0x1ac] sm:$0xf] %vm2649, %v2500
        %2758 = vst.msk [vmem:[%s295 + $0x1b0] sm:$0xf] %vm2649, %v2501
        %2759 = vst.msk [vmem:[%s295 + $0x1b4] sm:$0xf] %vm2649, %v2502
        %2760 = vst.msk [vmem:[%s295 + $0x1b8] sm:$0xf] %vm2649, %v2503
        %2761 = vst.msk [vmem:[%s295 + $0x1bc] sm:$0xf] %vm2649, %v2504
        %2762 = vst.msk [vmem:[%s295 + $0x1c0] sm:$0xf] %vm2649, %v2505
        %2763 = vst.msk [vmem:[%s295 + $0x1c4] sm:$0xf] %vm2649, %v2506
        %2764 = vst.msk [vmem:[%s295 + $0x1c8] sm:$0xf] %vm2649, %v2507
        %2765 = vst.msk [vmem:[%s295 + $0x1cc] sm:$0xf] %vm2649, %v2508
        %2766 = vst.msk [vmem:[%s295 + $0x1d0] sm:$0xf] %vm2649, %v2509
        %2767 = vst.msk [vmem:[%s295 + $0x1d4] sm:$0xf] %vm2649, %v2510
        %2768 = vst.msk [vmem:[%s295 + $0x1d8] sm:$0xf] %vm2649, %v2511
        %2769 = vst.msk [vmem:[%s295 + $0x1dc] sm:$0xf] %vm2649, %v2512
        %2770 = vst.msk [vmem:[%s295 + $0x1e0] sm:$0xf] %vm2649, %v2513
        %2771 = vst.msk [vmem:[%s295 + $0x1e4] sm:$0xf] %vm2649, %v2514
        %2772 = vst.msk [vmem:[%s295 + $0x1e8] sm:$0xf] %vm2649, %v2515
        %2773 = vst.msk [vmem:[%s295 + $0x1ec] sm:$0xf] %vm2649, %v2516
        %2774 = vst.msk [vmem:[%s295 + $0x1f0] sm:$0xf] %vm2649, %v2517
        %2775 = vst.msk [vmem:[%s295 + $0x1f4] sm:$0xf] %vm2649, %v2518
        %2776 = vst.msk [vmem:[%s295 + $0x1f8] sm:$0xf] %vm2649, %v2519
        %2777 = vst.msk [vmem:[%s295 + $0x1fc] sm:$0xf] %vm2649, %v2520
        %s2778 = smul.u32 128, %s23
        %p2779 = scmp.lt.s32.totalorder %s2778, 2303
        %s2780 = scalar_select %p2779, %s2778, 2303
        %p2781 = scmp.lt.s32.totalorder %s24, 0
        %s2782 = scalar_select %p2781, %s24, 0
        %s2783 = sadd.s32 %s2782, %s2780
        %s2784 = smul.addr %s2783, 4
        %s2785 = scalar_lea.vmem %s4, %s2784
        // Predicated region
        $region49: #{tpu_custom_call.1} parent=35 // pred_check
          %p2786 = pneg %p155
        $region50: #{tpu_custom_call.1} parent=35 // pred_check_branch
          %2788 = sbr.rel (%p2786) target = $region52
        $region51: #{tpu_custom_call.1} parent=35 // pred_region
          %s2789 = smul.u32 128, %s23
        $region52: #{tpu_custom_call.1} parent=35 // pred_fallthru
          _
      $region36: #{tpu_custom_call.1} parent=5 // pred_fallthru
        _
      %p2790 = scmp.le.s32.totalorder 2, %s14
      // Predicated region
      $region53: #{tpu_custom_call.1} parent=5 // pred_check
        %p2791 = pneg %p2790
      $region54: #{tpu_custom_call.1} parent=5 // pred_check_branch
        %2793 = sbr.rel (%p2791) target = $region56
      $region55: #{tpu_custom_call.1} parent=5 // pred_region
        %s2794 = ssub.s32 %s14, 2
        // Predicated region
        $region57: #{tpu_custom_call.1} parent=55 // pred_check
          %p2795 = pneg %p161
        $region58: #{tpu_custom_call.1} parent=55 // pred_check_branch
          %2797 = sbr.rel (%p2795) target = $region60
        $region59: #{tpu_custom_call.1} parent=55 // pred_region
          %s2798 = smul.u32 128, %s25
          %p2799 = scmp.lt.s32.totalorder %s2798, 2303
          %s2800 = scalar_select %p2799, %s2798, 2303
          %p2801 = scmp.lt.s32.totalorder %s26, 0
          %s2802 = scalar_select %p2801, %s26, 0
          %s2803 = sadd.s32 %s2802, %s2800
          %s2804 = smul.addr %s2803, 4
          %s2805 = scalar_lea.vmem %s4, %s2804
        $region60: #{tpu_custom_call.1} parent=55 // pred_fallthru
          _
      $region56: #{tpu_custom_call.1} parent=5 // pred_fallthru
        _
    $region6: #{tpu_custom_call.1} parent=1 // loop_footer
      %s18 = sadd.s32 1, %s14
    $region7: #{tpu_custom_call.1} parent=1 // loop_footer_branch
      %13 = sbr.rel target = $region3
    $region8: #{tpu_custom_call.1} parent=1 // loop_exit
      _
    %2806 = vsyncpa [#allocation3], 1
    %s2807 = scalar_lea.sflag [#allocation3], 1
    %2808 = vsyncpa %s2807, 1
    %2809 = vsyncpa [#allocation5], 1

</llo_original>
